<compile_context>
chip_gen: v7x
topology: tpu7x:2x2x1
jax: 0.10.0
libtpu: 0.0.40
codegen_flags: <defaults>
</compile_context>

<pallas_src>
import math
import jax
import jax.numpy as jnp
from jax import lax
from jax.scipy.special import erf as _erf_ref
from jax.experimental import pallas as pl
from jax.experimental.pallas import tpu as pltpu

# --- small "config" (FormalVerificationConfig analogue, scaled down) ---
HIDDEN = 32            # config.hidden_size
INTERMEDIATE = 64      # config.intermediate_size
NUM_HEADS = 4          # config.num_attention_heads
HEAD_DIM = HIDDEN // NUM_HEADS
LN_EPS = 1e-5          # nn.LayerNorm default eps in TransformerEncoderLayer
PACK = 4               # batch rows packed per 128-lane vreg row
HP = PACK * HIDDEN     # 128 packed lanes


def _round_up(x, m):
    return (x + m - 1) // m * m


def _cdiv(a, b):
    return (a + b - 1) // b


def _dot(a, b):
    return jnp.dot(a, b, preferred_element_type=jnp.float32)


_GELU_C = math.sqrt(2.0 / math.pi)


def _gelu(x):
    # tanh-approximate GELU (EUP tanh) — perf-review item; ~1e-3 from exact erf
    return 0.5 * x * (1.0 + jnp.tanh(_GELU_C * (x + 0.044715 * x * x * x)))


def _group_layernorm(x, w, b, seg32, seg32t):
    # LayerNorm over each 32-lane group (one packed batch row each), biased var
    mu = _dot(x, seg32) * (1.0 / HIDDEN)                 # [TR, 4]
    xc = x - _dot(mu, seg32t)
    var = _dot(xc * xc, seg32) * (1.0 / HIDDEN)          # [TR, 4]
    inv = lax.rsqrt(var + LN_EPS)
    return xc * _dot(inv, seg32t) * w + b


def proof_step_kernel(prev_ref, axiom_ref, goal_ref,
                      w_attn_ref, w1_ref, w2_ref, vw1_ref,
                      seg32_ref, seg32t_ref, seg8_ref, seg8t_ref, const_ref,
                      next_ref, val_ref):
    prev = prev_ref[...]        # [TR, 128]  (4 batch rows per packed row)
    axiom = axiom_ref[...]
    goal = goal_ref[...]

    w_attn = w_attn_ref[...]    # [128, 512] = bd4(Wq) | bd4(Wk) | bd4(Wv) | bd4(Wo)
    seg32, seg32t = seg32_ref[...], seg32t_ref[...]   # [128,4], [4,128]
    seg8, seg8t = seg8_ref[...], seg8t_ref[...]       # [128,16], [16,128]
    c = const_ref[...]          # [8, 256] coalesced biases / LN params / vw2 / vb2

    bq, bk = c[0:1, 0:HP], c[0:1, HP:2 * HP]
    bv, bo = c[1:2, 0:HP], c[1:2, HP:2 * HP]
    ln1w, ln1b = c[2:3, 0:HP], c[2:3, HP:2 * HP]
    ln2w, ln2b = c[3:4, 0:HP], c[3:4, HP:2 * HP]
    b1 = c[4:5, :]                                     # [1, 256]
    b2, vb1 = c[5:6, 0:HP], c[5:6, HP:2 * HP]
    vw2, vb2 = c[6:7, 0:HP], c[6:7, HP:HP + 1]

    # ---- projections: block-diagonal weights, no 3-token concat, no dead q rows ----
    qkv_p = _dot(prev, w_attn[:, 0:3 * HP])            # [TR, 384] : q|k|v for token 0
    q0 = qkv_p[:, 0:HP] + bq
    k_p = qkv_p[:, HP:2 * HP] + bk
    v_p = qkv_p[:, 2 * HP:3 * HP] + bv
    kv_a = _dot(axiom, w_attn[:, HP:3 * HP])           # [TR, 256] : k|v only
    k_a, v_a = kv_a[:, 0:HP] + bk, kv_a[:, HP:2 * HP] + bv
    kv_g = _dot(goal, w_attn[:, HP:3 * HP])
    k_g, v_g = kv_g[:, 0:HP] + bk, kv_g[:, HP:2 * HP] + bv

    # ---- packed per-(row, head) attention over the 3 key tokens ----
    scale = 1.0 / math.sqrt(HEAD_DIM)
    s_p = _dot(q0 * k_p, seg8) * scale                 # [TR, 16] = (slot, head) scores
    s_a = _dot(q0 * k_a, seg8) * scale
    s_g = _dot(q0 * k_g, seg8) * scale
    m = jnp.maximum(jnp.maximum(s_p, s_a), s_g)
    e_p, e_a, e_g = jnp.exp(s_p - m), jnp.exp(s_a - m), jnp.exp(s_g - m)
    inv = pl.reciprocal(e_p + e_a + e_g, approx=True)  # EUP, not a VALU divide
    attn = (_dot(e_p * inv, seg8t) * v_p
            + _dot(e_a * inv, seg8t) * v_a
            + _dot(e_g * inv, seg8t) * v_g)            # [TR, 128]
    attn0 = _dot(attn, w_attn[:, 3 * HP:4 * HP]) + bo

    # ---- residual + LayerNorm 1 (dropout = identity in eval mode) ----
    y0 = _group_layernorm(prev + attn0, ln1w, ln1b, seg32, seg32t)

    # ---- feed-forward (GELU) + residual + LayerNorm 2 ----
    h_ff = _gelu(_dot(y0, w1_ref[...]) + b1)           # [TR, 256]
    ff = _dot(h_ff, w2_ref[...]) + b2
    next_step = _group_layernorm(y0 + ff, ln2w, ln2b, seg32, seg32t)

    # ---- validity head: Linear(3H->H) -> GELU -> Linear(H->1) -> Sigmoid ----
    vw1 = vw1_ref[...]                                 # [128, 384]
    h1 = (_dot(prev, vw1[:, 0:HP]) + _dot(axiom, vw1[:, HP:2 * HP])
          + _dot(next_step, vw1[:, 2 * HP:3 * HP]) + vb1)
    logit = _dot(_gelu(h1) * vw2, seg32) + vb2         # [TR, 4]
    validity = jax.nn.sigmoid(logit)

    # ---- dense outputs: [TR,128] next_step slab + [TR,4] validity stripe ----
    next_ref[...] = next_step
    val_ref[...] = validity


def proof_step_forward(kparams, previous_step, axiom_embedding, goal_embedding=None,
                       tile_b=2048):
    if goal_embedding is None:
        goal_embedding = jnp.zeros_like(previous_step)
    (w_attn_bd, w1_bd, w2_bd, vw1_bd, seg32, seg32t, seg8, seg8t, const) = kparams
    B, H = previous_step.shape
    assert H == HIDDEN

    # pad ONLY to a multiple of PACK=4 (<=3 tail rows; no-op when B % 4 == 0),
    # then a free contiguous reshape lane-packs 4 rows per 128-lane vreg row.
    Bp = _round_up(B, PACK)

    def prep(x):
        x = x.astype(jnp.float32)
        if Bp != B:
            x = jnp.pad(x, ((0, Bp - B), (0, 0)))
        return x.reshape(Bp // PACK, HP)

    prev_p = prep(previous_step)
    ax_p = prep(axiom_embedding)
    goal_p = prep(goal_embedding)
    R = Bp // PACK

    # big packed-row tile (amortize per-step overhead), multiple of 8 sublanes,
    # but keep >= 2 grid steps when possible so "parallel" feeds both v7x TCs.
    tgt = max(8, _round_up(max(tile_b, PACK) // PACK, 8))
    if R <= 8:
        tile_r = R
    else:
        tile_r = min(tgt, _round_up(_cdiv(R, 2), 8))
    grid = (_cdiv(R, tile_r),)

    act_spec = pl.BlockSpec((tile_r, HP), lambda i: (i, 0))

    def wspec(a):
        return pl.BlockSpec(a.shape, lambda i: (0, 0))   # VMEM-resident constants

    next_packed, val_packed = pl.pallas_call(
        proof_step_kernel,
        out_shape=(jax.ShapeDtypeStruct((R, HP), jnp.float32),
                   jax.ShapeDtypeStruct((R, PACK), jnp.float32)),
        grid_spec=pltpu.PrefetchScalarGridSpec(
            num_scalar_prefetch=0,
            grid=grid,
            in_specs=[act_spec, act_spec, act_spec,
                      wspec(w_attn_bd), wspec(w1_bd), wspec(w2_bd), wspec(vw1_bd),
                      wspec(seg32), wspec(seg32t), wspec(seg8), wspec(seg8t),
                      wspec(const)],
            out_specs=[pl.BlockSpec((tile_r, HP), lambda i: (i, 0)),
                       pl.BlockSpec((tile_r, PACK), lambda i: (i, 0))],
        ),
        compiler_params=pltpu.CompilerParams(
            dimension_semantics=("parallel",),
            vmem_limit_bytes=32 * 1024 * 1024),
    )(prev_p, ax_p, goal_p, w_attn_bd, w1_bd, w2_bd, vw1_bd,
      seg32, seg32t, seg8, seg8t, const)

    next_step = next_packed.reshape(Bp, HIDDEN)[:B]
    validity = val_packed.reshape(Bp, 1)[:B]
    return next_step, validity


# ---------------- parameters ----------------
def init_params(key):
    """Deterministic synthetic base parameters ([in, out] convention)."""
    H, I = HIDDEN, INTERMEDIATE
    ks = jax.random.split(key, 16)
    scale = 0.05

    def w(k, shape):
        return scale * jax.random.normal(k, shape, jnp.float32)

    return dict(
        wq=w(ks[0], (H, H)), wk=w(ks[1], (H, H)), wv=w(ks[2], (H, H)), wo=w(ks[3], (H, H)),
        w1=w(ks[4], (H, I)), w2=w(ks[5], (I, H)),
        vw1=w(ks[6], (3 * H, H)), vw2=w(ks[7], (H,)),
        bq=w(ks[8], (H,)), bk=w(ks[9], (H,)), bv=w(ks[10], (H,)), bo=w(ks[11], (H,)),
        b1=w(ks[12], (I,)), b2=w(ks[13], (H,)), vb1=w(ks[14], (H,)), vb2=w(ks[15], (1,)),
        ln1w=jnp.ones((H,), jnp.float32), ln1b=jnp.zeros((H,), jnp.float32),
        ln2w=jnp.ones((H,), jnp.float32), ln2b=jnp.zeros((H,), jnp.float32),
    )


def pack_params(p):
    """Expand base params into lane-packed (4x block-diagonal) kernel slabs."""
    H = HIDDEN
    eye = jnp.eye(PACK, dtype=jnp.float32)

    def bd(w):
        return jnp.kron(eye, w.astype(jnp.float32))      # 4x block-diagonal

    def tile4(v):
        return jnp.tile(v.astype(jnp.float32), PACK)

    w_attn_bd = jnp.concatenate([bd(p['wq']), bd(p['wk']), bd(p['wv']), bd(p['wo'])], axis=1)
    w1_bd = bd(p['w1'])                                   # [128, 256]
    w2_bd = bd(p['w2'])                                   # [256, 128]
    vw1_bd = jnp.concatenate([bd(p['vw1'][0:H]), bd(p['vw1'][H:2 * H]),
                              bd(p['vw1'][2 * H:3 * H])], axis=1)   # [128, 384]

    c = jnp.zeros((8, 2 * HP), jnp.float32)
    c = c.at[0, 0:HP].set(tile4(p['bq'])).at[0, HP:].set(tile4(p['bk']))
    c = c.at[1, 0:HP].set(tile4(p['bv'])).at[1, HP:].set(tile4(p['bo']))
    c = c.at[2, 0:HP].set(tile4(p['ln1w'])).at[2, HP:].set(tile4(p['ln1b']))
    c = c.at[3, 0:HP].set(tile4(p['ln2w'])).at[3, HP:].set(tile4(p['ln2b']))
    c = c.at[4, :].set(tile4(p['b1']))
    c = c.at[5, 0:HP].set(tile4(p['b2'])).at[5, HP:].set(tile4(p['vb1']))
    c = c.at[6, 0:HP].set(tile4(p['vw2'])).at[6, HP].set(p['vb2'][0])

    lane = jnp.arange(HP)
    seg32 = (lane[:, None] // HIDDEN == jnp.arange(PACK)[None, :]).astype(jnp.float32)
    seg8 = (lane[:, None] // HEAD_DIM ==
            jnp.arange(PACK * NUM_HEADS)[None, :]).astype(jnp.float32)
    return (w_attn_bd, w1_bd, w2_bd, vw1_bd, seg32, seg32.T, seg8, seg8.T, c)


# ---------------- pure-JAX reference (exact erf-GELU, matches PyTorch) ----------------
def _layernorm_ref(x, w, b):
    mu = jnp.mean(x, axis=-1, keepdims=True)
    var = jnp.mean((x - mu) ** 2, axis=-1, keepdims=True)
    return (x - mu) * lax.rsqrt(var + LN_EPS) * w + b


def _gelu_exact(x):
    return 0.5 * x * (1.0 + _erf_ref(x / math.sqrt(2.0)))


def proof_step_reference(p, prev, axiom, goal):
    H = HIDDEN
    B = prev.shape[0]
    x = jnp.stack([prev, axiom, goal], axis=1)                       # [B, 3, H]
    q = x @ p['wq'] + p['bq']; k = x @ p['wk'] + p['bk']; v = x @ p['wv'] + p['bv']
    qh = q.reshape(B, 3, NUM_HEADS, HEAD_DIM).transpose(0, 2, 1, 3)
    kh = k.reshape(B, 3, NUM_HEADS, HEAD_DIM).transpose(0, 2, 1, 3)
    vh = v.reshape(B, 3, NUM_HEADS, HEAD_DIM).transpose(0, 2, 1, 3)
    s = jnp.einsum('bhqd,bhkd->bhqk', qh, kh) / math.sqrt(HEAD_DIM)
    pr = jax.nn.softmax(s, axis=-1)
    o = jnp.einsum('bhqk,bhkd->bhqd', pr, vh).transpose(0, 2, 1, 3).reshape(B, 3, H)
    attn = o @ p['wo'] + p['bo']
    y = _layernorm_ref(x + attn, p['ln1w'], p['ln1b'])
    ff = _gelu_exact(y @ p['w1'] + p['b1']) @ p['w2'] + p['b2']
    out = _layernorm_ref(y + ff, p['ln2w'], p['ln2b'])
    next_step = out[:, 0]
    vin = jnp.concatenate([prev, axiom, next_step], axis=1)
    logit = _gelu_exact(vin @ p['vw1'] + p['vb1']) @ p['vw2'].reshape(H, 1) + p['vb2']
    return next_step, jax.nn.sigmoid(logit)


if __name__ == "__main__":
    key = jax.random.PRNGKey(0)
    kp, ka, kg, kw = jax.random.split(key, 4)
    base = init_params(kw)
    kparams = pack_params(base)

    # --- small shape implied by the module: batch=2, hidden=32 ---
    B = 2
    previous_step = jax.random.normal(kp, (B, HIDDEN), jnp.float32)
    axiom_embedding = jax.random.normal(ka, (B, HIDDEN), jnp.float32)
    goal_embedding = jax.random.normal(kg, (B, HIDDEN), jnp.float32)

    next_step, validity = proof_step_forward(kparams, previous_step,
                                             axiom_embedding, goal_embedding)
    jax.block_until_ready((next_step, validity))

    assert next_step.shape == (B, HIDDEN)
    assert validity.shape == (B, 1)
    assert bool(jnp.all(jnp.isfinite(next_step)))
    assert bool(jnp.all((validity >= 0.0) & (validity <= 1.0)))

    n_ref, v_ref = proof_step_reference(base, previous_step, axiom_embedding, goal_embedding)
    # tolerance covers tanh-GELU (~1e-3) + approx-reciprocal softmax drift
    assert bool(jnp.allclose(next_step, n_ref, atol=1e-2, rtol=1e-2))
    assert bool(jnp.allclose(validity, v_ref, atol=1e-2, rtol=1e-2))

    # --- second check: multi-step grid, ragged last block, goal_embedding=None path ---
    B2 = 48
    kp2, ka2 = jax.random.split(jax.random.PRNGKey(1), 2)
    prev2 = jax.random.normal(kp2, (B2, HIDDEN), jnp.float32)
    ax2 = jax.random.normal(ka2, (B2, HIDDEN), jnp.float32)
    n2, v2 = proof_step_forward(kparams, prev2, ax2, None, tile_b=32)
    jax.block_until_ready((n2, v2))
    n2_ref, v2_ref = proof_step_reference(base, prev2, ax2, jnp.zeros_like(prev2))
    assert bool(jnp.allclose(n2, n2_ref, atol=1e-2, rtol=1e-2))
    assert bool(jnp.allclose(v2, v2_ref, atol=1e-2, rtol=1e-2))

    print("KERNEL_OK")
</pallas_src>

<mosaic_0001>
module attributes {stable_mosaic.version = 11 : i64} {
  func.func @proof_step_kernel(%arg0: i32, %arg1: memref<1x128xf32, #tpu.memory_space<vmem>>, %arg2: memref<1x128xf32, #tpu.memory_space<vmem>>, %arg3: memref<1x128xf32, #tpu.memory_space<vmem>>, %arg4: memref<128x512xf32, #tpu.memory_space<vmem>>, %arg5: memref<128x256xf32, #tpu.memory_space<vmem>>, %arg6: memref<256x128xf32, #tpu.memory_space<vmem>>, %arg7: memref<128x384xf32, #tpu.memory_space<vmem>>, %arg8: memref<128x4xf32, #tpu.memory_space<vmem>>, %arg9: memref<4x128xf32, #tpu.memory_space<vmem>>, %arg10: memref<128x16xf32, #tpu.memory_space<vmem>>, %arg11: memref<16x128xf32, #tpu.memory_space<vmem>>, %arg12: memref<8x256xf32, #tpu.memory_space<vmem>>, %arg13: memref<1x128xf32, #tpu.memory_space<vmem>>, %arg14: memref<1x4xf32, #tpu.memory_space<vmem>>) attributes {dimension_semantics = [#tpu.dimension_semantics<parallel>], iteration_bounds = array<i64: 1>, scalar_prefetch = 0 : i64, scratch_operands = 0 : i64, tpu.core_type = #tpu.core_type<tc>, window_params = [{transform_indices = @transform_0, window_bounds = array<i64: 1, 128>}, {transform_indices = @transform_1, window_bounds = array<i64: 1, 128>}, {transform_indices = @transform_2, window_bounds = array<i64: 1, 128>}, {pipeline_mode = #tpu.pipeline_mode<synchronous>, transform_indices = @transform_3, window_bounds = array<i64: 128, 512>}, {pipeline_mode = #tpu.pipeline_mode<synchronous>, transform_indices = @transform_4, window_bounds = array<i64: 128, 256>}, {pipeline_mode = #tpu.pipeline_mode<synchronous>, transform_indices = @transform_5, window_bounds = array<i64: 256, 128>}, {pipeline_mode = #tpu.pipeline_mode<synchronous>, transform_indices = @transform_6, window_bounds = array<i64: 128, 384>}, {pipeline_mode = #tpu.pipeline_mode<synchronous>, transform_indices = @transform_7, window_bounds = array<i64: 128, 4>}, {pipeline_mode = #tpu.pipeline_mode<synchronous>, transform_indices = @transform_8, window_bounds = array<i64: 4, 128>}, {pipeline_mode = #tpu.pipeline_mode<synchronous>, transform_indices = @transform_9, window_bounds = array<i64: 128, 16>}, {pipeline_mode = #tpu.pipeline_mode<synchronous>, transform_indices = @transform_10, window_bounds = array<i64: 16, 128>}, {pipeline_mode = #tpu.pipeline_mode<synchronous>, transform_indices = @transform_11, window_bounds = array<i64: 8, 256>}, {transform_indices = @transform_12, window_bounds = array<i64: 1, 128>}, {transform_indices = @transform_13, window_bounds = array<i64: 1, 4>}]} {
    %c0 = arith.constant 0 : index
    %c0_0 = arith.constant 0 : index
    %0 = vector.load %arg1[%c0, %c0_0] : memref<1x128xf32, #tpu.memory_space<vmem>>, vector<1x128xf32>
    %c0_1 = arith.constant 0 : index
    %c0_2 = arith.constant 0 : index
    %1 = vector.load %arg2[%c0_1, %c0_2] : memref<1x128xf32, #tpu.memory_space<vmem>>, vector<1x128xf32>
    %c0_3 = arith.constant 0 : index
    %c0_4 = arith.constant 0 : index
    %2 = vector.load %arg3[%c0_3, %c0_4] : memref<1x128xf32, #tpu.memory_space<vmem>>, vector<1x128xf32>
    %c0_5 = arith.constant 0 : index
    %c0_6 = arith.constant 0 : index
    %3 = vector.load %arg4[%c0_5, %c0_6] : memref<128x512xf32, #tpu.memory_space<vmem>>, vector<128x512xf32>
    %c0_7 = arith.constant 0 : index
    %c0_8 = arith.constant 0 : index
    %4 = vector.load %arg8[%c0_7, %c0_8] : memref<128x4xf32, #tpu.memory_space<vmem>>, vector<128x4xf32>
    %c0_9 = arith.constant 0 : index
    %c0_10 = arith.constant 0 : index
    %5 = vector.load %arg9[%c0_9, %c0_10] : memref<4x128xf32, #tpu.memory_space<vmem>>, vector<4x128xf32>
    %c0_11 = arith.constant 0 : index
    %c0_12 = arith.constant 0 : index
    %6 = vector.load %arg10[%c0_11, %c0_12] : memref<128x16xf32, #tpu.memory_space<vmem>>, vector<128x16xf32>
    %c0_13 = arith.constant 0 : index
    %c0_14 = arith.constant 0 : index
    %7 = vector.load %arg11[%c0_13, %c0_14] : memref<16x128xf32, #tpu.memory_space<vmem>>, vector<16x128xf32>
    %c0_15 = arith.constant 0 : index
    %c0_16 = arith.constant 0 : index
    %8 = vector.load %arg12[%c0_15, %c0_16] : memref<8x256xf32, #tpu.memory_space<vmem>>, vector<8x256xf32>
    %9 = vector.extract_strided_slice %8 {offsets = [0, 0], sizes = [1, 128], strides = [1, 1]} : vector<8x256xf32> to vector<1x128xf32>
    %10 = vector.extract_strided_slice %8 {offsets = [0, 128], sizes = [1, 128], strides = [1, 1]} : vector<8x256xf32> to vector<1x128xf32>
    %11 = vector.extract_strided_slice %8 {offsets = [1, 0], sizes = [1, 128], strides = [1, 1]} : vector<8x256xf32> to vector<1x128xf32>
    %12 = vector.extract_strided_slice %8 {offsets = [1, 128], sizes = [1, 128], strides = [1, 1]} : vector<8x256xf32> to vector<1x128xf32>
    %13 = vector.extract_strided_slice %8 {offsets = [2, 0], sizes = [1, 128], strides = [1, 1]} : vector<8x256xf32> to vector<1x128xf32>
    %14 = vector.extract_strided_slice %8 {offsets = [2, 128], sizes = [1, 128], strides = [1, 1]} : vector<8x256xf32> to vector<1x128xf32>
    %15 = vector.extract_strided_slice %8 {offsets = [3, 0], sizes = [1, 128], strides = [1, 1]} : vector<8x256xf32> to vector<1x128xf32>
    %16 = vector.extract_strided_slice %8 {offsets = [3, 128], sizes = [1, 128], strides = [1, 1]} : vector<8x256xf32> to vector<1x128xf32>
    %17 = vector.extract_strided_slice %8 {offsets = [4, 0], sizes = [1, 256], strides = [1, 1]} : vector<8x256xf32> to vector<1x256xf32>
    %18 = vector.extract_strided_slice %8 {offsets = [5, 0], sizes = [1, 128], strides = [1, 1]} : vector<8x256xf32> to vector<1x128xf32>
    %19 = vector.extract_strided_slice %8 {offsets = [5, 128], sizes = [1, 128], strides = [1, 1]} : vector<8x256xf32> to vector<1x128xf32>
    %20 = vector.extract_strided_slice %8 {offsets = [6, 0], sizes = [1, 128], strides = [1, 1]} : vector<8x256xf32> to vector<1x128xf32>
    %21 = vector.extract_strided_slice %8 {offsets = [6, 128], sizes = [1, 1], strides = [1, 1]} : vector<8x256xf32> to vector<1x1xf32>
    %22 = vector.extract_strided_slice %3 {offsets = [0, 0], sizes = [128, 384], strides = [1, 1]} : vector<128x512xf32> to vector<128x384xf32>
    %cst = arith.constant dense<0.000000e+00> : vector<1x384xf32>
    %23 = tpu.matmul %0, %22, %cst {dimension_numbers = #tpu.dot_dimension_numbers<[1], [0], [0], [1], [0, 0, 1, 1], [], []>} : vector<1x128xf32>, vector<128x384xf32>, vector<1x384xf32> -> vector<1x384xf32>
    %24 = vector.extract_strided_slice %23 {offsets = [0, 0], sizes = [1, 128], strides = [1, 1]} : vector<1x384xf32> to vector<1x128xf32>
    %25 = arith.addf %24, %9 : vector<1x128xf32>
    %26 = vector.extract_strided_slice %23 {offsets = [0, 128], sizes = [1, 128], strides = [1, 1]} : vector<1x384xf32> to vector<1x128xf32>
    %27 = arith.addf %26, %10 : vector<1x128xf32>
    %28 = vector.extract_strided_slice %23 {offsets = [0, 256], sizes = [1, 128], strides = [1, 1]} : vector<1x384xf32> to vector<1x128xf32>
    %29 = arith.addf %28, %11 : vector<1x128xf32>
    %30 = vector.extract_strided_slice %3 {offsets = [0, 128], sizes = [128, 256], strides = [1, 1]} : vector<128x512xf32> to vector<128x256xf32>
    %cst_17 = arith.constant dense<0.000000e+00> : vector<1x256xf32>
    %31 = tpu.matmul %1, %30, %cst_17 {dimension_numbers = #tpu.dot_dimension_numbers<[1], [0], [0], [1], [0, 0, 1, 1], [], []>} : vector<1x128xf32>, vector<128x256xf32>, vector<1x256xf32> -> vector<1x256xf32>
    %32 = vector.extract_strided_slice %31 {offsets = [0, 0], sizes = [1, 128], strides = [1, 1]} : vector<1x256xf32> to vector<1x128xf32>
    %33 = arith.addf %32, %10 : vector<1x128xf32>
    %34 = vector.extract_strided_slice %31 {offsets = [0, 128], sizes = [1, 128], strides = [1, 1]} : vector<1x256xf32> to vector<1x128xf32>
    %35 = arith.addf %34, %11 : vector<1x128xf32>
    %36 = vector.extract_strided_slice %3 {offsets = [0, 128], sizes = [128, 256], strides = [1, 1]} : vector<128x512xf32> to vector<128x256xf32>
    %cst_18 = arith.constant dense<0.000000e+00> : vector<1x256xf32>
    %37 = tpu.matmul %2, %36, %cst_18 {dimension_numbers = #tpu.dot_dimension_numbers<[1], [0], [0], [1], [0, 0, 1, 1], [], []>} : vector<1x128xf32>, vector<128x256xf32>, vector<1x256xf32> -> vector<1x256xf32>
    %38 = vector.extract_strided_slice %37 {offsets = [0, 0], sizes = [1, 128], strides = [1, 1]} : vector<1x256xf32> to vector<1x128xf32>
    %39 = arith.addf %38, %10 : vector<1x128xf32>
    %40 = vector.extract_strided_slice %37 {offsets = [0, 128], sizes = [1, 128], strides = [1, 1]} : vector<1x256xf32> to vector<1x128xf32>
    %41 = arith.addf %40, %11 : vector<1x128xf32>
    %42 = arith.mulf %25, %27 : vector<1x128xf32>
    %cst_19 = arith.constant dense<0.000000e+00> : vector<1x16xf32>
    %43 = tpu.matmul %42, %6, %cst_19 {dimension_numbers = #tpu.dot_dimension_numbers<[1], [0], [0], [1], [0, 0, 1, 1], [], []>} : vector<1x128xf32>, vector<128x16xf32>, vector<1x16xf32> -> vector<1x16xf32>
    %cst_20 = arith.constant 0.353553385 : f32
    %44 = vector.broadcast %cst_20 : f32 to vector<1x16xf32>
    %45 = arith.mulf %43, %44 : vector<1x16xf32>
    %46 = arith.mulf %25, %33 : vector<1x128xf32>
    %cst_21 = arith.constant dense<0.000000e+00> : vector<1x16xf32>
    %47 = tpu.matmul %46, %6, %cst_21 {dimension_numbers = #tpu.dot_dimension_numbers<[1], [0], [0], [1], [0, 0, 1, 1], [], []>} : vector<1x128xf32>, vector<128x16xf32>, vector<1x16xf32> -> vector<1x16xf32>
    %cst_22 = arith.constant 0.353553385 : f32
    %48 = vector.broadcast %cst_22 : f32 to vector<1x16xf32>
    %49 = arith.mulf %47, %48 : vector<1x16xf32>
    %50 = arith.mulf %25, %39 : vector<1x128xf32>
    %cst_23 = arith.constant dense<0.000000e+00> : vector<1x16xf32>
    %51 = tpu.matmul %50, %6, %cst_23 {dimension_numbers = #tpu.dot_dimension_numbers<[1], [0], [0], [1], [0, 0, 1, 1], [], []>} : vector<1x128xf32>, vector<128x16xf32>, vector<1x16xf32> -> vector<1x16xf32>
    %cst_24 = arith.constant 0.353553385 : f32
    %52 = vector.broadcast %cst_24 : f32 to vector<1x16xf32>
    %53 = arith.mulf %51, %52 : vector<1x16xf32>
    %54 = arith.maximumf %45, %49 : vector<1x16xf32>
    %55 = arith.maximumf %54, %53 : vector<1x16xf32>
    %56 = arith.subf %45, %55 : vector<1x16xf32>
    %57 = math.exp %56 : vector<1x16xf32>
    %58 = arith.subf %49, %55 : vector<1x16xf32>
    %59 = math.exp %58 : vector<1x16xf32>
    %60 = arith.subf %53, %55 : vector<1x16xf32>
    %61 = math.exp %60 : vector<1x16xf32>
    %62 = arith.addf %57, %59 : vector<1x16xf32>
    %63 = arith.addf %62, %61 : vector<1x16xf32>
    %64 = tpu.reciprocal %63 {approx = true} : vector<1x16xf32> -> vector<1x16xf32>
    %65 = arith.mulf %57, %64 : vector<1x16xf32>
    %cst_25 = arith.constant dense<0.000000e+00> : vector<1x128xf32>
    %66 = tpu.matmul %65, %7, %cst_25 {dimension_numbers = #tpu.dot_dimension_numbers<[1], [0], [0], [1], [0, 0, 1, 1], [], []>} : vector<1x16xf32>, vector<16x128xf32>, vector<1x128xf32> -> vector<1x128xf32>
    %67 = arith.mulf %66, %29 : vector<1x128xf32>
    %68 = arith.mulf %59, %64 : vector<1x16xf32>
    %cst_26 = arith.constant dense<0.000000e+00> : vector<1x128xf32>
    %69 = tpu.matmul %68, %7, %cst_26 {dimension_numbers = #tpu.dot_dimension_numbers<[1], [0], [0], [1], [0, 0, 1, 1], [], []>} : vector<1x16xf32>, vector<16x128xf32>, vector<1x128xf32> -> vector<1x128xf32>
    %70 = arith.mulf %69, %35 : vector<1x128xf32>
    %71 = arith.addf %67, %70 : vector<1x128xf32>
    %72 = arith.mulf %61, %64 : vector<1x16xf32>
    %cst_27 = arith.constant dense<0.000000e+00> : vector<1x128xf32>
    %73 = tpu.matmul %72, %7, %cst_27 {dimension_numbers = #tpu.dot_dimension_numbers<[1], [0], [0], [1], [0, 0, 1, 1], [], []>} : vector<1x16xf32>, vector<16x128xf32>, vector<1x128xf32> -> vector<1x128xf32>
    %74 = arith.mulf %73, %41 : vector<1x128xf32>
    %75 = arith.addf %71, %74 : vector<1x128xf32>
    %76 = vector.extract_strided_slice %3 {offsets = [0, 384], sizes = [128, 128], strides = [1, 1]} : vector<128x512xf32> to vector<128x128xf32>
    %cst_28 = arith.constant dense<0.000000e+00> : vector<1x128xf32>
    %77 = tpu.matmul %75, %76, %cst_28 {dimension_numbers = #tpu.dot_dimension_numbers<[1], [0], [0], [1], [0, 0, 1, 1], [], []>} : vector<1x128xf32>, vector<128x128xf32>, vector<1x128xf32> -> vector<1x128xf32>
    %78 = arith.addf %77, %12 : vector<1x128xf32>
    %79 = arith.addf %0, %78 : vector<1x128xf32>
    %cst_29 = arith.constant dense<0.000000e+00> : vector<1x4xf32>
    %80 = tpu.matmul %79, %4, %cst_29 {dimension_numbers = #tpu.dot_dimension_numbers<[1], [0], [0], [1], [0, 0, 1, 1], [], []>} : vector<1x128xf32>, vector<128x4xf32>, vector<1x4xf32> -> vector<1x4xf32>
    %cst_30 = arith.constant 3.125000e-02 : f32
    %81 = vector.broadcast %cst_30 : f32 to vector<1x4xf32>
    %82 = arith.mulf %80, %81 : vector<1x4xf32>
    %cst_31 = arith.constant dense<0.000000e+00> : vector<1x128xf32>
    %83 = tpu.matmul %82, %5, %cst_31 {dimension_numbers = #tpu.dot_dimension_numbers<[1], [0], [0], [1], [0, 0, 1, 1], [], []>} : vector<1x4xf32>, vector<4x128xf32>, vector<1x128xf32> -> vector<1x128xf32>
    %84 = arith.subf %79, %83 : vector<1x128xf32>
    %85 = arith.mulf %84, %84 : vector<1x128xf32>
    %cst_32 = arith.constant dense<0.000000e+00> : vector<1x4xf32>
    %86 = tpu.matmul %85, %4, %cst_32 {dimension_numbers = #tpu.dot_dimension_numbers<[1], [0], [0], [1], [0, 0, 1, 1], [], []>} : vector<1x128xf32>, vector<128x4xf32>, vector<1x4xf32> -> vector<1x4xf32>
    %cst_33 = arith.constant 3.125000e-02 : f32
    %87 = vector.broadcast %cst_33 : f32 to vector<1x4xf32>
    %88 = arith.mulf %86, %87 : vector<1x4xf32>
    %cst_34 = arith.constant 9.99999974E-6 : f32
    %89 = vector.broadcast %cst_34 : f32 to vector<1x4xf32>
    %90 = arith.addf %88, %89 : vector<1x4xf32>
    %91 = math.rsqrt %90 : vector<1x4xf32>
    %cst_35 = arith.constant dense<0.000000e+00> : vector<1x128xf32>
    %92 = tpu.matmul %91, %5, %cst_35 {dimension_numbers = #tpu.dot_dimension_numbers<[1], [0], [0], [1], [0, 0, 1, 1], [], []>} : vector<1x4xf32>, vector<4x128xf32>, vector<1x128xf32> -> vector<1x128xf32>
    %93 = arith.mulf %84, %92 : vector<1x128xf32>
    %94 = arith.mulf %93, %13 : vector<1x128xf32>
    %95 = arith.addf %94, %14 : vector<1x128xf32>
    %c0_36 = arith.constant 0 : index
    %c0_37 = arith.constant 0 : index
    %96 = vector.load %arg5[%c0_36, %c0_37] : memref<128x256xf32, #tpu.memory_space<vmem>>, vector<128x256xf32>
    %cst_38 = arith.constant dense<0.000000e+00> : vector<1x256xf32>
    %97 = tpu.matmul %95, %96, %cst_38 {dimension_numbers = #tpu.dot_dimension_numbers<[1], [0], [0], [1], [0, 0, 1, 1], [], []>} : vector<1x128xf32>, vector<128x256xf32>, vector<1x256xf32> -> vector<1x256xf32>
    %98 = arith.addf %97, %17 : vector<1x256xf32>
    %cst_39 = arith.constant 5.000000e-01 : f32
    %99 = vector.broadcast %cst_39 : f32 to vector<1x256xf32>
    %100 = arith.mulf %99, %98 : vector<1x256xf32>
    %cst_40 = arith.constant 4.471500e-02 : f32
    %101 = vector.broadcast %cst_40 : f32 to vector<1x256xf32>
    %102 = arith.mulf %101, %98 : vector<1x256xf32>
    %103 = arith.mulf %102, %98 : vector<1x256xf32>
    %104 = arith.mulf %103, %98 : vector<1x256xf32>
    %105 = arith.addf %98, %104 : vector<1x256xf32>
    %cst_41 = arith.constant 0.797884583 : f32
    %106 = vector.broadcast %cst_41 : f32 to vector<1x256xf32>
    %107 = arith.mulf %106, %105 : vector<1x256xf32>
    %108 = math.tanh %107 : vector<1x256xf32>
    %cst_42 = arith.constant 1.000000e+00 : f32
    %109 = vector.broadcast %cst_42 : f32 to vector<1x256xf32>
    %110 = arith.addf %109, %108 : vector<1x256xf32>
    %111 = arith.mulf %100, %110 : vector<1x256xf32>
    %c0_43 = arith.constant 0 : index
    %c0_44 = arith.constant 0 : index
    %112 = vector.load %arg6[%c0_43, %c0_44] : memref<256x128xf32, #tpu.memory_space<vmem>>, vector<256x128xf32>
    %cst_45 = arith.constant dense<0.000000e+00> : vector<1x128xf32>
    %113 = tpu.matmul %111, %112, %cst_45 {dimension_numbers = #tpu.dot_dimension_numbers<[1], [0], [0], [1], [0, 0, 1, 1], [], []>} : vector<1x256xf32>, vector<256x128xf32>, vector<1x128xf32> -> vector<1x128xf32>
    %114 = arith.addf %113, %18 : vector<1x128xf32>
    %115 = arith.addf %95, %114 : vector<1x128xf32>
    %cst_46 = arith.constant dense<0.000000e+00> : vector<1x4xf32>
    %116 = tpu.matmul %115, %4, %cst_46 {dimension_numbers = #tpu.dot_dimension_numbers<[1], [0], [0], [1], [0, 0, 1, 1], [], []>} : vector<1x128xf32>, vector<128x4xf32>, vector<1x4xf32> -> vector<1x4xf32>
    %cst_47 = arith.constant 3.125000e-02 : f32
    %117 = vector.broadcast %cst_47 : f32 to vector<1x4xf32>
    %118 = arith.mulf %116, %117 : vector<1x4xf32>
    %cst_48 = arith.constant dense<0.000000e+00> : vector<1x128xf32>
    %119 = tpu.matmul %118, %5, %cst_48 {dimension_numbers = #tpu.dot_dimension_numbers<[1], [0], [0], [1], [0, 0, 1, 1], [], []>} : vector<1x4xf32>, vector<4x128xf32>, vector<1x128xf32> -> vector<1x128xf32>
    %120 = arith.subf %115, %119 : vector<1x128xf32>
    %121 = arith.mulf %120, %120 : vector<1x128xf32>
    %cst_49 = arith.constant dense<0.000000e+00> : vector<1x4xf32>
    %122 = tpu.matmul %121, %4, %cst_49 {dimension_numbers = #tpu.dot_dimension_numbers<[1], [0], [0], [1], [0, 0, 1, 1], [], []>} : vector<1x128xf32>, vector<128x4xf32>, vector<1x4xf32> -> vector<1x4xf32>
    %cst_50 = arith.constant 3.125000e-02 : f32
    %123 = vector.broadcast %cst_50 : f32 to vector<1x4xf32>
    %124 = arith.mulf %122, %123 : vector<1x4xf32>
    %cst_51 = arith.constant 9.99999974E-6 : f32
    %125 = vector.broadcast %cst_51 : f32 to vector<1x4xf32>
    %126 = arith.addf %124, %125 : vector<1x4xf32>
    %127 = math.rsqrt %126 : vector<1x4xf32>
    %cst_52 = arith.constant dense<0.000000e+00> : vector<1x128xf32>
    %128 = tpu.matmul %127, %5, %cst_52 {dimension_numbers = #tpu.dot_dimension_numbers<[1], [0], [0], [1], [0, 0, 1, 1], [], []>} : vector<1x4xf32>, vector<4x128xf32>, vector<1x128xf32> -> vector<1x128xf32>
    %129 = arith.mulf %120, %128 : vector<1x128xf32>
    %130 = arith.mulf %129, %15 : vector<1x128xf32>
    %131 = arith.addf %130, %16 : vector<1x128xf32>
    %c0_53 = arith.constant 0 : index
    %c0_54 = arith.constant 0 : index
    %132 = vector.load %arg7[%c0_53, %c0_54] : memref<128x384xf32, #tpu.memory_space<vmem>>, vector<128x384xf32>
    %133 = vector.extract_strided_slice %132 {offsets = [0, 0], sizes = [128, 128], strides = [1, 1]} : vector<128x384xf32> to vector<128x128xf32>
    %cst_55 = arith.constant dense<0.000000e+00> : vector<1x128xf32>
    %134 = tpu.matmul %0, %133, %cst_55 {dimension_numbers = #tpu.dot_dimension_numbers<[1], [0], [0], [1], [0, 0, 1, 1], [], []>} : vector<1x128xf32>, vector<128x128xf32>, vector<1x128xf32> -> vector<1x128xf32>
    %135 = vector.extract_strided_slice %132 {offsets = [0, 128], sizes = [128, 128], strides = [1, 1]} : vector<128x384xf32> to vector<128x128xf32>
    %cst_56 = arith.constant dense<0.000000e+00> : vector<1x128xf32>
    %136 = tpu.matmul %1, %135, %cst_56 {dimension_numbers = #tpu.dot_dimension_numbers<[1], [0], [0], [1], [0, 0, 1, 1], [], []>} : vector<1x128xf32>, vector<128x128xf32>, vector<1x128xf32> -> vector<1x128xf32>
    %137 = arith.addf %134, %136 : vector<1x128xf32>
    %138 = vector.extract_strided_slice %132 {offsets = [0, 256], sizes = [128, 128], strides = [1, 1]} : vector<128x384xf32> to vector<128x128xf32>
    %cst_57 = arith.constant dense<0.000000e+00> : vector<1x128xf32>
    %139 = tpu.matmul %131, %138, %cst_57 {dimension_numbers = #tpu.dot_dimension_numbers<[1], [0], [0], [1], [0, 0, 1, 1], [], []>} : vector<1x128xf32>, vector<128x128xf32>, vector<1x128xf32> -> vector<1x128xf32>
    %140 = arith.addf %137, %139 : vector<1x128xf32>
    %141 = arith.addf %140, %19 : vector<1x128xf32>
    %cst_58 = arith.constant 5.000000e-01 : f32
    %142 = vector.broadcast %cst_58 : f32 to vector<1x128xf32>
    %143 = arith.mulf %142, %141 : vector<1x128xf32>
    %cst_59 = arith.constant 4.471500e-02 : f32
    %144 = vector.broadcast %cst_59 : f32 to vector<1x128xf32>
    %145 = arith.mulf %144, %141 : vector<1x128xf32>
    %146 = arith.mulf %145, %141 : vector<1x128xf32>
    %147 = arith.mulf %146, %141 : vector<1x128xf32>
    %148 = arith.addf %141, %147 : vector<1x128xf32>
    %cst_60 = arith.constant 0.797884583 : f32
    %149 = vector.broadcast %cst_60 : f32 to vector<1x128xf32>
    %150 = arith.mulf %149, %148 : vector<1x128xf32>
    %151 = math.tanh %150 : vector<1x128xf32>
    %cst_61 = arith.constant 1.000000e+00 : f32
    %152 = vector.broadcast %cst_61 : f32 to vector<1x128xf32>
    %153 = arith.addf %152, %151 : vector<1x128xf32>
    %154 = arith.mulf %143, %153 : vector<1x128xf32>
    %155 = arith.mulf %154, %20 : vector<1x128xf32>
    %cst_62 = arith.constant dense<0.000000e+00> : vector<1x4xf32>
    %156 = tpu.matmul %155, %4, %cst_62 {dimension_numbers = #tpu.dot_dimension_numbers<[1], [0], [0], [1], [0, 0, 1, 1], [], []>} : vector<1x128xf32>, vector<128x4xf32>, vector<1x4xf32> -> vector<1x4xf32>
    %157 = vector.broadcast %21 : vector<1x1xf32> to vector<1x4xf32>
    %158 = arith.addf %156, %157 : vector<1x4xf32>
    %159 = arith.negf %158 : vector<1x4xf32>
    %160 = math.exp %159 : vector<1x4xf32>
    %cst_63 = arith.constant 1.000000e+00 : f32
    %161 = vector.broadcast %cst_63 : f32 to vector<1x4xf32>
    %162 = arith.addf %161, %160 : vector<1x4xf32>
    %163 = arith.divf %161, %162 : vector<1x4xf32>
    %c0_64 = arith.constant 0 : index
    %c0_65 = arith.constant 0 : index
    %164 = vector.load %arg13[%c0_64, %c0_65] : memref<1x128xf32, #tpu.memory_space<vmem>>, vector<1x128xf32>
    tpu.vector_store %arg13[%c0_64, %c0_65], %131 {strides = array<i32>} : memref<1x128xf32, #tpu.memory_space<vmem>>, vector<1x128xf32>,
    %c0_66 = arith.constant 0 : index
    %c0_67 = arith.constant 0 : index
    %165 = vector.load %arg14[%c0_66, %c0_67] : memref<1x4xf32, #tpu.memory_space<vmem>>, vector<1x4xf32>
    tpu.vector_store %arg14[%c0_66, %c0_67], %163 {strides = array<i32>} : memref<1x4xf32, #tpu.memory_space<vmem>>, vector<1x4xf32>,
    return
  }
  func.func @transform_0(%arg0: i32) -> (i32, i32) {
    %c0_i32 = arith.constant 0 : i32
    %c0_i32_0 = arith.constant 0 : i32
    return %arg0, %c0_i32 : i32, i32
  }
  func.func @transform_1(%arg0: i32) -> (i32, i32) {
    %c0_i32 = arith.constant 0 : i32
    %c0_i32_0 = arith.constant 0 : i32
    return %arg0, %c0_i32 : i32, i32
  }
  func.func @transform_2(%arg0: i32) -> (i32, i32) {
    %c0_i32 = arith.constant 0 : i32
    %c0_i32_0 = arith.constant 0 : i32
    return %arg0, %c0_i32 : i32, i32
  }
  func.func @transform_3(%arg0: i32) -> (i32, i32) {
    %c0_i32 = arith.constant 0 : i32
    %c0_i32_0 = arith.constant 0 : i32
    %c0_i32_1 = arith.constant 0 : i32
    return %c0_i32, %c0_i32_0 : i32, i32
  }
  func.func @transform_4(%arg0: i32) -> (i32, i32) {
    %c0_i32 = arith.constant 0 : i32
    %c0_i32_0 = arith.constant 0 : i32
    %c0_i32_1 = arith.constant 0 : i32
    return %c0_i32, %c0_i32_0 : i32, i32
  }
  func.func @transform_5(%arg0: i32) -> (i32, i32) {
    %c0_i32 = arith.constant 0 : i32
    %c0_i32_0 = arith.constant 0 : i32
    %c0_i32_1 = arith.constant 0 : i32
    return %c0_i32, %c0_i32_0 : i32, i32
  }
  func.func @transform_6(%arg0: i32) -> (i32, i32) {
    %c0_i32 = arith.constant 0 : i32
    %c0_i32_0 = arith.constant 0 : i32
    %c0_i32_1 = arith.constant 0 : i32
    return %c0_i32, %c0_i32_0 : i32, i32
  }
  func.func @transform_7(%arg0: i32) -> (i32, i32) {
    %c0_i32 = arith.constant 0 : i32
    %c0_i32_0 = arith.constant 0 : i32
    %c0_i32_1 = arith.constant 0 : i32
    return %c0_i32, %c0_i32_0 : i32, i32
  }
  func.func @transform_8(%arg0: i32) -> (i32, i32) {
    %c0_i32 = arith.constant 0 : i32
    %c0_i32_0 = arith.constant 0 : i32
    %c0_i32_1 = arith.constant 0 : i32
    return %c0_i32, %c0_i32_0 : i32, i32
  }
  func.func @transform_9(%arg0: i32) -> (i32, i32) {
    %c0_i32 = arith.constant 0 : i32
    %c0_i32_0 = arith.constant 0 : i32
    %c0_i32_1 = arith.constant 0 : i32
    return %c0_i32, %c0_i32_0 : i32, i32
  }
  func.func @transform_10(%arg0: i32) -> (i32, i32) {
    %c0_i32 = arith.constant 0 : i32
    %c0_i32_0 = arith.constant 0 : i32
    %c0_i32_1 = arith.constant 0 : i32
    return %c0_i32, %c0_i32_0 : i32, i32
  }
  func.func @transform_11(%arg0: i32) -> (i32, i32) {
    %c0_i32 = arith.constant 0 : i32
    %c0_i32_0 = arith.constant 0 : i32
    %c0_i32_1 = arith.constant 0 : i32
    return %c0_i32, %c0_i32_0 : i32, i32
  }
  func.func @transform_12(%arg0: i32) -> (i32, i32) {
    %c0_i32 = arith.constant 0 : i32
    %c0_i32_0 = arith.constant 0 : i32
    return %arg0, %c0_i32 : i32, i32
  }
  func.func @transform_13(%arg0: i32) -> (i32, i32) {
    %c0_i32 = arith.constant 0 : i32
    %c0_i32_0 = arith.constant 0 : i32
    return %arg0, %c0_i32 : i32, i32
  }
}

</mosaic_0001>

<llo_original>
// kernel: tpu_custom_call.1
$region0: #{tpu_custom_call.1}
  #allocation0 [shape = 'u32[]', space=smem, size = 0x4, offset = 0x4, fixed_abs, tag = 'smem constant byte address 0x4 - core index']
  #allocation1 [shape = 'u32[144,128]{1,0:T(1,128)}', space=vmem, size = 0x12000, scoped, tag = 'internal scratch']
  %s0 = inlined_call_operand.vmem [shape: f32[1,128], index: 0, kind: input, shape index: {}]
  %s1 = inlined_call_operand.vmem [shape: f32[1,128], index: 1, kind: input, shape index: {}]
  %s2 = inlined_call_operand.hbm [shape: f32[1,128], index: 2, kind: input, shape index: {}]
  %s3 = inlined_call_operand.hbm [shape: f32[128,512], index: 3, kind: input, shape index: {}]
  %s4 = inlined_call_operand.vmem [shape: f32[128,256], index: 4, kind: input, shape index: {}]
  %s5 = inlined_call_operand.hbm [shape: f32[256,128], index: 5, kind: input, shape index: {}]
  %s6 = inlined_call_operand.hbm [shape: f32[128,384], index: 6, kind: input, shape index: {}]
  %s7 = inlined_call_operand.vmem [shape: f32[128,4], index: 7, kind: input, shape index: {}]
  %s8 = inlined_call_operand.hbm [shape: f32[4,128], index: 8, kind: input, shape index: {}]
  %s9 = inlined_call_operand.vmem [shape: f32[128,16], index: 9, kind: input, shape index: {}]
  %s10 = inlined_call_operand.vmem [shape: f32[16,128], index: 10, kind: input, shape index: {}]
  %s11 = inlined_call_operand.vmem [shape: f32[8,256], index: 11, kind: input, shape index: {}]
  %s12 = inlined_call_operand.hbm [shape: f32[1,128], index: 12, kind: output, shape index: {0}]
  %s13 = inlined_call_operand.hbm [shape: f32[1,4], index: 13, kind: output, shape index: {1}]
  %14 = xla_tuple %s12, %s13
  %s15 = sld [smem:[#allocation0]]
  $region86: #{tpu_custom_call.1} parent=0
    _
  %s17 = ssub.s32 1, %s15
  %s18 = scalar_select 0, %s17, %s15
  $region1: #{tpu_custom_call.1} parent=0
    #allocation2 [shape = 'u8[512]{0}', space=vmem, size = 0x400, scoped, tag = 'input window, operand 2, single buffered']
    #allocation3 [shape = 's32[1]{0}', space=sflag, size = 0x4, scoped, tag = 'scoped memory for tpu_custom_call.1']
    #allocation4 [shape = 's32[1]{0}', space=sflag, size = 0x4, scoped, tag = 'scoped memory for tpu_custom_call.1']
    #allocation5 [shape = 'u8[262144]{0}', space=vmem, size = 0x40000, scoped, tag = 'input window, operand 3, single buffered']
    #allocation6 [shape = 's32[1]{0}', space=sflag, size = 0x4, scoped, tag = 'scoped memory for tpu_custom_call.1']
    #allocation7 [shape = 'u8[131072]{0}', space=vmem, size = 0x20000, scoped, tag = 'input window, operand 5, single buffered']
    #allocation8 [shape = 'u8[196608]{0}', space=vmem, size = 0x30000, scoped, tag = 'input window, operand 6, single buffered']
    #allocation9 [shape = 's32[1]{0}', space=sflag, size = 0x4, scoped, tag = 'scoped memory for tpu_custom_call.1']
    #allocation10 [shape = 'u8[2048]{0}', space=vmem, size = 0x800, scoped, tag = 'input window, operand 8, single buffered']
    #allocation11 [shape = 'u8[512]{0}', space=vmem, size = 0x400, scoped, tag = 'output window, operand 0, single buffered']
    #allocation12 [shape = 'u8[512]{0}', space=vmem, size = 0x400, scoped, tag = 'output window, operand 1, single buffered']
    #allocation13 [shape = 's32[1]{0}', space=sflag, size = 0x4, scoped, tag = 'scoped memory for tpu_custom_call.1']
    %19 = vsyncpa [#allocation3], 0
    %20 = vsyncpa [#allocation6], 0
    %21 = vsyncpa [#allocation9], 0
    %22 = vsyncpa [#allocation4], 0
    %23 = vsyncpa [#allocation13], 0
    // Predicated region
    $region2: #{tpu_custom_call.1} parent=1 // pred_check
      _
    $region3: #{tpu_custom_call.1} parent=1 // pred_check_branch
      %25 = sbr.rel (0) target = $region5
    $region4: #{tpu_custom_call.1} parent=1 // pred_region
      _
    $region5: #{tpu_custom_call.1} parent=1 // pred_fallthru
      _
    // Predicated region
    $region6: #{tpu_custom_call.1} parent=1 // pred_check
      _
    $region7: #{tpu_custom_call.1} parent=1 // pred_check_branch
      %27 = sbr.rel (0) target = $region9
    $region8: #{tpu_custom_call.1} parent=1 // pred_region
      _
    $region9: #{tpu_custom_call.1} parent=1 // pred_fallthru
      _
    // Predicated region
    $region10: #{tpu_custom_call.1} parent=1 // pred_check
      _
    $region11: #{tpu_custom_call.1} parent=1 // pred_check_branch
      %29 = sbr.rel (0) target = $region13
    $region12: #{tpu_custom_call.1} parent=1 // pred_region
      %s31 = ssub.s32 16, 16
      %32 = vsyncadd [#allocation3], %s31
      %s34 = sshll.u32 [#allocation2], 4
      %s35 = int_to_ptr.vmem [resolvable:$true] %s34
      %37 = dma.hbm_to_vmem [thread:$0]  %s2, 16, %s35, [#allocation3]
    $region13: #{tpu_custom_call.1} parent=1 // pred_fallthru
      _
    // Predicated region
    $region14: #{tpu_custom_call.1} parent=1 // pred_check
      _
    $region15: #{tpu_custom_call.1} parent=1 // pred_check_branch
      %39 = sbr.rel (0) target = $region17
    $region16: #{tpu_custom_call.1} parent=1 // pred_region
      %s41 = ssub.s32 8192, 8192
      %42 = vsyncadd [#allocation6], %s41
      %s43 = sshll.u32 [#allocation5], 4
      %s44 = int_to_ptr.vmem [resolvable:$true] %s43
      %49 = dma.hbm_to_vmem [thread:$0]  %s3, 8192, %s44, [#allocation6], 512, 512, 32
    $region17: #{tpu_custom_call.1} parent=1 // pred_fallthru
      _
    // Predicated region
    $region18: #{tpu_custom_call.1} parent=1 // pred_check
      _
    $region19: #{tpu_custom_call.1} parent=1 // pred_check_branch
      %51 = sbr.rel (0) target = $region21
    $region20: #{tpu_custom_call.1} parent=1 // pred_region
      _
    $region21: #{tpu_custom_call.1} parent=1 // pred_fallthru
      _
    // Predicated region
    $region22: #{tpu_custom_call.1} parent=1 // pred_check
      _
    $region23: #{tpu_custom_call.1} parent=1 // pred_check_branch
      %53 = sbr.rel (0) target = $region25
    $region24: #{tpu_custom_call.1} parent=1 // pred_region
      %s55 = ssub.s32 4096, 4096
      %56 = vsyncadd [#allocation6], %s55
      %s57 = sshll.u32 [#allocation7], 4
      %s58 = int_to_ptr.vmem [resolvable:$true] %s57
      %63 = dma.hbm_to_vmem [thread:$0]  %s5, 4096, %s58, [#allocation6], 128, 128, 8
    $region25: #{tpu_custom_call.1} parent=1 // pred_fallthru
      _
    // Predicated region
    $region26: #{tpu_custom_call.1} parent=1 // pred_check
      _
    $region27: #{tpu_custom_call.1} parent=1 // pred_check_branch
      %65 = sbr.rel (0) target = $region29
    $region28: #{tpu_custom_call.1} parent=1 // pred_region
      %s67 = ssub.s32 6144, 6144
      %68 = vsyncadd [#allocation9], %s67
      %s69 = sshll.u32 [#allocation8], 4
      %s70 = int_to_ptr.vmem [resolvable:$true] %s69
      %75 = dma.hbm_to_vmem [thread:$0]  %s6, 6144, %s70, [#allocation9], 384, 384, 24
    $region29: #{tpu_custom_call.1} parent=1 // pred_fallthru
      _
    // Predicated region
    $region30: #{tpu_custom_call.1} parent=1 // pred_check
      _
    $region31: #{tpu_custom_call.1} parent=1 // pred_check_branch
      %77 = sbr.rel (0) target = $region33
    $region32: #{tpu_custom_call.1} parent=1 // pred_region
      _
    $region33: #{tpu_custom_call.1} parent=1 // pred_fallthru
      _
    // Predicated region
    $region34: #{tpu_custom_call.1} parent=1 // pred_check
      _
    $region35: #{tpu_custom_call.1} parent=1 // pred_check_branch
      %79 = sbr.rel (0) target = $region37
    $region36: #{tpu_custom_call.1} parent=1 // pred_region
      %s81 = ssub.s32 64, 64
      %82 = vsyncadd [#allocation9], %s81
      %s84 = sshll.u32 [#allocation10], 4
      %s85 = int_to_ptr.vmem [resolvable:$true] %s84
      %87 = dma.hbm_to_vmem [thread:$0]  %s8, 64, %s85, [#allocation9]
    $region37: #{tpu_custom_call.1} parent=1 // pred_fallthru
      _
    // Predicated region
    $region38: #{tpu_custom_call.1} parent=1 // pred_check
      _
    $region39: #{tpu_custom_call.1} parent=1 // pred_check_branch
      %89 = sbr.rel (0) target = $region41
    $region40: #{tpu_custom_call.1} parent=1 // pred_region
      _
    $region41: #{tpu_custom_call.1} parent=1 // pred_fallthru
      _
    // Predicated region
    $region42: #{tpu_custom_call.1} parent=1 // pred_check
      _
    $region43: #{tpu_custom_call.1} parent=1 // pred_check_branch
      %91 = sbr.rel (0) target = $region45
    $region44: #{tpu_custom_call.1} parent=1 // pred_region
      _
    $region45: #{tpu_custom_call.1} parent=1 // pred_fallthru
      _
    // Predicated region
    $region46: #{tpu_custom_call.1} parent=1 // pred_check
      _
    $region47: #{tpu_custom_call.1} parent=1 // pred_check_branch
      %93 = sbr.rel (0) target = $region49
    $region48: #{tpu_custom_call.1} parent=1 // pred_region
      _
    $region49: #{tpu_custom_call.1} parent=1 // pred_fallthru
      _
    // Predicated region
    $region50: #{tpu_custom_call.1} parent=1 // pred_check
      _
    $region51: #{tpu_custom_call.1} parent=1 // pred_check_branch
      %95 = sbr.rel (0) target = $region53
    $region52: #{tpu_custom_call.1} parent=1 // pred_region
      %96 = dma.done [#allocation3], 16
    $region53: #{tpu_custom_call.1} parent=1 // pred_fallthru
      _
    // Predicated region
    $region54: #{tpu_custom_call.1} parent=1 // pred_check
      _
    $region55: #{tpu_custom_call.1} parent=1 // pred_check_branch
      %98 = sbr.rel (0) target = $region57
    $region56: #{tpu_custom_call.1} parent=1 // pred_region
      %99 = dma.done [#allocation6], 8192
    $region57: #{tpu_custom_call.1} parent=1 // pred_fallthru
      _
    // Predicated region
    $region58: #{tpu_custom_call.1} parent=1 // pred_check
      _
    $region59: #{tpu_custom_call.1} parent=1 // pred_check_branch
      %101 = sbr.rel (0) target = $region61
    $region60: #{tpu_custom_call.1} parent=1 // pred_region
      %102 = dma.done [#allocation6], 4096
    $region61: #{tpu_custom_call.1} parent=1 // pred_fallthru
      _
    // Predicated region
    $region62: #{tpu_custom_call.1} parent=1 // pred_check
      _
    $region63: #{tpu_custom_call.1} parent=1 // pred_check_branch
      %104 = sbr.rel (0) target = $region65
    $region64: #{tpu_custom_call.1} parent=1 // pred_region
      %105 = dma.done [#allocation9], 6144
    $region65: #{tpu_custom_call.1} parent=1 // pred_fallthru
      _
    // Predicated region
    $region66: #{tpu_custom_call.1} parent=1 // pred_check
      _
    $region67: #{tpu_custom_call.1} parent=1 // pred_check_branch
      %107 = sbr.rel (0) target = $region69
    $region68: #{tpu_custom_call.1} parent=1 // pred_region
      %108 = dma.done [#allocation9], 64
    $region69: #{tpu_custom_call.1} parent=1 // pred_fallthru
      _
    %v109 = vld [vmem:[%s0] sm:$0x1]
    %v110 = vld [vmem:[%s1] sm:$0x1]
    %v111 = vld [vmem:[#allocation2] sm:$0x1]
    %v112 = vld [vmem:[#allocation5] sm:$0xff]
    %v113 = vld [vmem:[#allocation5 + $0x8] sm:$0xff]
    %v114 = vld [vmem:[#allocation5 + $0x10] sm:$0xff]
    %v115 = vld [vmem:[#allocation5 + $0x18] sm:$0xff]
    %v116 = vld [vmem:[#allocation5 + $0x20] sm:$0xff]
    %v117 = vld [vmem:[#allocation5 + $0x28] sm:$0xff]
    %v118 = vld [vmem:[#allocation5 + $0x30] sm:$0xff]
    %v119 = vld [vmem:[#allocation5 + $0x38] sm:$0xff]
    %v120 = vld [vmem:[#allocation5 + $0x40] sm:$0xff]
    %v121 = vld [vmem:[#allocation5 + $0x48] sm:$0xff]
    %v122 = vld [vmem:[#allocation5 + $0x50] sm:$0xff]
    %v123 = vld [vmem:[#allocation5 + $0x58] sm:$0xff]
    %v124 = vld [vmem:[#allocation5 + $0x60] sm:$0xff]
    %v125 = vld [vmem:[#allocation5 + $0x68] sm:$0xff]
    %v126 = vld [vmem:[#allocation5 + $0x70] sm:$0xff]
    %v127 = vld [vmem:[#allocation5 + $0x78] sm:$0xff]
    %v128 = vld [vmem:[#allocation5 + $0x80] sm:$0xff]
    %v129 = vld [vmem:[#allocation5 + $0x88] sm:$0xff]
    %v130 = vld [vmem:[#allocation5 + $0x90] sm:$0xff]
    %v131 = vld [vmem:[#allocation5 + $0x98] sm:$0xff]
    %v132 = vld [vmem:[#allocation5 + $0xa0] sm:$0xff]
    %v133 = vld [vmem:[#allocation5 + $0xa8] sm:$0xff]
    %v134 = vld [vmem:[#allocation5 + $0xb0] sm:$0xff]
    %v135 = vld [vmem:[#allocation5 + $0xb8] sm:$0xff]
    %v136 = vld [vmem:[#allocation5 + $0xc0] sm:$0xff]
    %v137 = vld [vmem:[#allocation5 + $0xc8] sm:$0xff]
    %v138 = vld [vmem:[#allocation5 + $0xd0] sm:$0xff]
    %v139 = vld [vmem:[#allocation5 + $0xd8] sm:$0xff]
    %v140 = vld [vmem:[#allocation5 + $0xe0] sm:$0xff]
    %v141 = vld [vmem:[#allocation5 + $0xe8] sm:$0xff]
    %v142 = vld [vmem:[#allocation5 + $0xf0] sm:$0xff]
    %v143 = vld [vmem:[#allocation5 + $0xf8] sm:$0xff]
    %v144 = vld [vmem:[#allocation5 + $0x100] sm:$0xff]
    %v145 = vld [vmem:[#allocation5 + $0x108] sm:$0xff]
    %v146 = vld [vmem:[#allocation5 + $0x110] sm:$0xff]
    %v147 = vld [vmem:[#allocation5 + $0x118] sm:$0xff]
    %v148 = vld [vmem:[#allocation5 + $0x120] sm:$0xff]
    %v149 = vld [vmem:[#allocation5 + $0x128] sm:$0xff]
    %v150 = vld [vmem:[#allocation5 + $0x130] sm:$0xff]
    %v151 = vld [vmem:[#allocation5 + $0x138] sm:$0xff]
    %v152 = vld [vmem:[#allocation5 + $0x140] sm:$0xff]
    %v153 = vld [vmem:[#allocation5 + $0x148] sm:$0xff]
    %v154 = vld [vmem:[#allocation5 + $0x150] sm:$0xff]
    %v155 = vld [vmem:[#allocation5 + $0x158] sm:$0xff]
    %v156 = vld [vmem:[#allocation5 + $0x160] sm:$0xff]
    %v157 = vld [vmem:[#allocation5 + $0x168] sm:$0xff]
    %v158 = vld [vmem:[#allocation5 + $0x170] sm:$0xff]
    %v159 = vld [vmem:[#allocation5 + $0x178] sm:$0xff]
    %v160 = vld [vmem:[#allocation5 + $0x180] sm:$0xff]
    %v161 = vld [vmem:[#allocation5 + $0x188] sm:$0xff]
    %v162 = vld [vmem:[#allocation5 + $0x190] sm:$0xff]
    %v163 = vld [vmem:[#allocation5 + $0x198] sm:$0xff]
    %v164 = vld [vmem:[#allocation5 + $0x1a0] sm:$0xff]
    %v165 = vld [vmem:[#allocation5 + $0x1a8] sm:$0xff]
    %v166 = vld [vmem:[#allocation5 + $0x1b0] sm:$0xff]
    %v167 = vld [vmem:[#allocation5 + $0x1b8] sm:$0xff]
    %v168 = vld [vmem:[#allocation5 + $0x1c0] sm:$0xff]
    %v169 = vld [vmem:[#allocation5 + $0x1c8] sm:$0xff]
    %v170 = vld [vmem:[#allocation5 + $0x1d0] sm:$0xff]
    %v171 = vld [vmem:[#allocation5 + $0x1d8] sm:$0xff]
    %v172 = vld [vmem:[#allocation5 + $0x1e0] sm:$0xff]
    %v173 = vld [vmem:[#allocation5 + $0x1e8] sm:$0xff]
    %v174 = vld [vmem:[#allocation5 + $0x1f0] sm:$0xff]
    %v175 = vld [vmem:[#allocation5 + $0x1f8] sm:$0xff]
    %v176 = vld [vmem:[%s7] sm:$0xff]
    %v177 = vld [vmem:[%s7 + $0x8] sm:$0xff]
    %v178 = vld [vmem:[%s7 + $0x10] sm:$0xff]
    %v179 = vld [vmem:[%s7 + $0x18] sm:$0xff]
    %v180 = vld [vmem:[%s7 + $0x20] sm:$0xff]
    %v181 = vld [vmem:[%s7 + $0x28] sm:$0xff]
    %v182 = vld [vmem:[%s7 + $0x30] sm:$0xff]
    %v183 = vld [vmem:[%s7 + $0x38] sm:$0xff]
    %v184 = vld [vmem:[%s7 + $0x40] sm:$0xff]
    %v185 = vld [vmem:[%s7 + $0x48] sm:$0xff]
    %v186 = vld [vmem:[%s7 + $0x50] sm:$0xff]
    %v187 = vld [vmem:[%s7 + $0x58] sm:$0xff]
    %v188 = vld [vmem:[%s7 + $0x60] sm:$0xff]
    %v189 = vld [vmem:[%s7 + $0x68] sm:$0xff]
    %v190 = vld [vmem:[%s7 + $0x70] sm:$0xff]
    %v191 = vld [vmem:[%s7 + $0x78] sm:$0xff]
    %v192 = vld [vmem:[#allocation10] sm:$0xf]
    %v193 = vld [vmem:[%s9] sm:$0xff]
    %v194 = vld [vmem:[%s9 + $0x8] sm:$0xff]
    %v195 = vld [vmem:[%s9 + $0x10] sm:$0xff]
    %v196 = vld [vmem:[%s9 + $0x18] sm:$0xff]
    %v197 = vld [vmem:[%s9 + $0x20] sm:$0xff]
    %v198 = vld [vmem:[%s9 + $0x28] sm:$0xff]
    %v199 = vld [vmem:[%s9 + $0x30] sm:$0xff]
    %v200 = vld [vmem:[%s9 + $0x38] sm:$0xff]
    %v201 = vld [vmem:[%s9 + $0x40] sm:$0xff]
    %v202 = vld [vmem:[%s9 + $0x48] sm:$0xff]
    %v203 = vld [vmem:[%s9 + $0x50] sm:$0xff]
    %v204 = vld [vmem:[%s9 + $0x58] sm:$0xff]
    %v205 = vld [vmem:[%s9 + $0x60] sm:$0xff]
    %v206 = vld [vmem:[%s9 + $0x68] sm:$0xff]
    %v207 = vld [vmem:[%s9 + $0x70] sm:$0xff]
    %v208 = vld [vmem:[%s9 + $0x78] sm:$0xff]
    %v209 = vld [vmem:[%s10] sm:$0xff]
    %v210 = vld [vmem:[%s10 + $0x8] sm:$0xff]
    %v211 = vld [vmem:[%s11] sm:$0xff]
    %v212 = vld [vmem:[%s11 + $0x8] sm:$0xff]
    %213 = vmatprep.subr.mxu0 %v113
    %214 = vmatpush1.msra.mxu0 %v112
    %215 = vmatprep.subr.mxu0 %v117
    %216 = vmatpush1.msra.mxu0 %v116
    %217 = vmatprep.subr.mxu0 %v121
    %218 = vmatpush1.msra.mxu0 %v120
    %219 = vmatprep.subr.mxu0 %v125
    %220 = vmatpush1.msra.mxu0 %v124
    %221 = vmatprep.subr.mxu0 %v129
    %222 = vmatpush1.msra.mxu0 %v128
    %223 = vmatprep.subr.mxu0 %v133
    %224 = vmatpush1.msra.mxu0 %v132
    %225 = vmatprep.subr.mxu0 %v137
    %226 = vmatpush1.msra.mxu0 %v136
    %227 = vmatprep.subr.mxu0 %v141
    %228 = vmatpush1.msra.mxu0 %v140
    %229 = vmatprep.subr.mxu0 %v145
    %230 = vmatpush1.msra.mxu0 %v144
    %231 = vmatprep.subr.mxu0 %v149
    %232 = vmatpush1.msra.mxu0 %v148
    %233 = vmatprep.subr.mxu0 %v153
    %234 = vmatpush1.msra.mxu0 %v152
    %235 = vmatprep.subr.mxu0 %v157
    %236 = vmatpush1.msra.mxu0 %v156
    %237 = vmatprep.subr.mxu0 %v161
    %238 = vmatpush1.msra.mxu0 %v160
    %239 = vmatprep.subr.mxu0 %v165
    %240 = vmatpush1.msra.mxu0 %v164
    %241 = vmatprep.subr.mxu0 %v169
    %242 = vmatpush1.msra.mxu0 %v168
    %243 = vmatprep.subr.mxu0 %v173
    %244 = vmatpush1.msra.mxu0 %v172
    %245 = vmatprep.subr.mxu0 0.0
    %246 = vmatpush1.msra.mxu0 0.0
    %247 = vmatprep.subr.mxu0 0.0
    %248 = vmatpush1.msra.mxu0 0.0
    %249 = vmatprep.subr.mxu0 0.0
    %250 = vmatpush1.msra.mxu0 0.0
    %251 = vmatprep.subr.mxu0 0.0
    %252 = vmatpush1.msra.mxu0 0.0
    %253 = vmatprep.subr.mxu0 0.0
    %254 = vmatpush1.msra.mxu0 0.0
    %255 = vmatprep.subr.mxu0 0.0
    %256 = vmatpush1.msra.mxu0 0.0
    %257 = vmatprep.subr.mxu0 0.0
    %258 = vmatpush1.msra.mxu0 0.0
    %259 = vmatprep.subr.mxu0 0.0
    %260 = vmatpush1.msra.mxu0 0.0
    %261 = vmatprep.subr.mxu0 0.0
    %262 = vmatpush1.msra.mxu0 0.0
    %263 = vmatprep.subr.mxu0 0.0
    %264 = vmatpush1.msra.mxu0 0.0
    %265 = vmatprep.subr.mxu0 0.0
    %266 = vmatpush1.msra.mxu0 0.0
    %267 = vmatprep.subr.mxu0 0.0
    %268 = vmatpush1.msra.mxu0 0.0
    %269 = vmatprep.subr.mxu0 0.0
    %270 = vmatpush1.msra.mxu0 0.0
    %271 = vmatprep.subr.mxu0 0.0
    %272 = vmatpush1.msra.mxu0 0.0
    %273 = vmatprep.subr.mxu0 0.0
    %274 = vmatpush1.msra.mxu0 0.0
    %275 = vmatprep.subr.mxu0 0.0
    %276 = vmatpush1.msra.mxu0 0.0
    %277 = vmatprep.mubr.f32.mxu0 0.0
    %278 = vmatmul.mubr.f32.gmra.mrb[0].mxu0 %v109
    %v279 = vpop.f32.mrb[0].mxu0
    %v280 = vadd.f32 0.0, %v279
    %v281 = vpop.f32.mrb[0].mxu0
    %v282 = vadd.f32 0.0, %v281
    %283 = vdwg.mxu0
    %284 = vmatprep.subr.mxu0 0.0
    %285 = vmatpush1.msra.mxu0 %v114
    %286 = vmatprep.subr.mxu0 0.0
    %287 = vmatpush1.msra.mxu0 %v118
    %288 = vmatprep.subr.mxu0 0.0
    %289 = vmatpush1.msra.mxu0 %v122
    %290 = vmatprep.subr.mxu0 0.0
    %291 = vmatpush1.msra.mxu0 %v126
    %292 = vmatprep.subr.mxu0 0.0
    %293 = vmatpush1.msra.mxu0 %v130
    %294 = vmatprep.subr.mxu0 0.0
    %295 = vmatpush1.msra.mxu0 %v134
    %296 = vmatprep.subr.mxu0 0.0
    %297 = vmatpush1.msra.mxu0 %v138
    %298 = vmatprep.subr.mxu0 0.0
    %299 = vmatpush1.msra.mxu0 %v142
    %300 = vmatprep.subr.mxu0 0.0
    %301 = vmatpush1.msra.mxu0 %v146
    %302 = vmatprep.subr.mxu0 0.0
    %303 = vmatpush1.msra.mxu0 %v150
    %304 = vmatprep.subr.mxu0 0.0
    %305 = vmatpush1.msra.mxu0 %v154
    %306 = vmatprep.subr.mxu0 0.0
    %307 = vmatpush1.msra.mxu0 %v158
    %308 = vmatprep.subr.mxu0 0.0
    %309 = vmatpush1.msra.mxu0 %v162
    %310 = vmatprep.subr.mxu0 0.0
    %311 = vmatpush1.msra.mxu0 %v166
    %312 = vmatprep.subr.mxu0 0.0
    %313 = vmatpush1.msra.mxu0 %v170
    %314 = vmatprep.subr.mxu0 0.0
    %315 = vmatpush1.msra.mxu0 %v174
    %316 = vmatprep.subr.mxu0 0.0
    %317 = vmatpush1.msra.mxu0 0.0
    %318 = vmatprep.subr.mxu0 0.0
    %319 = vmatpush1.msra.mxu0 0.0
    %320 = vmatprep.subr.mxu0 0.0
    %321 = vmatpush1.msra.mxu0 0.0
    %322 = vmatprep.subr.mxu0 0.0
    %323 = vmatpush1.msra.mxu0 0.0
    %324 = vmatprep.subr.mxu0 0.0
    %325 = vmatpush1.msra.mxu0 0.0
    %326 = vmatprep.subr.mxu0 0.0
    %327 = vmatpush1.msra.mxu0 0.0
    %328 = vmatprep.subr.mxu0 0.0
    %329 = vmatpush1.msra.mxu0 0.0
    %330 = vmatprep.subr.mxu0 0.0
    %331 = vmatpush1.msra.mxu0 0.0
    %332 = vmatprep.subr.mxu0 0.0
    %333 = vmatpush1.msra.mxu0 0.0
    %334 = vmatprep.subr.mxu0 0.0
    %335 = vmatpush1.msra.mxu0 0.0
    %336 = vmatprep.subr.mxu0 0.0
    %337 = vmatpush1.msra.mxu0 0.0
    %338 = vmatprep.subr.mxu0 0.0
    %339 = vmatpush1.msra.mxu0 0.0
    %340 = vmatprep.subr.mxu0 0.0
    %341 = vmatpush1.msra.mxu0 0.0
    %342 = vmatprep.subr.mxu0 0.0
    %343 = vmatpush1.msra.mxu0 0.0
    %344 = vmatprep.subr.mxu0 0.0
    %345 = vmatpush1.msra.mxu0 0.0
    %346 = vmatprep.subr.mxu0 0.0
    %347 = vmatpush1.msra.mxu0 0.0
    %348 = vmatprep.mubr.f32.mxu0 0.0
    %349 = vmatmul.mubr.f32.gmra.mrb[0].mxu0 %v109
    %v350 = vpop.f32.mrb[0].mxu0
    %v351 = vadd.f32 0.0, %v350
    %v352 = vpop.f32.mrb[0].mxu0
    %353 = vdwg.mxu0
    %v354 = vadd.f32 %v280, %v211
    %v355 = vadd.f32 %v282, %v212
    %v357 = vrot.slane %v211, 1
    %v359 = vadd.f32 %v351, %v357
    %360 = vmatprep.subr.mxu0 %v114
    %361 = vmatpush1.msra.mxu0 %v113
    %362 = vmatprep.subr.mxu0 %v118
    %363 = vmatpush1.msra.mxu0 %v117
    %364 = vmatprep.subr.mxu0 %v122
    %365 = vmatpush1.msra.mxu0 %v121
    %366 = vmatprep.subr.mxu0 %v126
    %367 = vmatpush1.msra.mxu0 %v125
    %368 = vmatprep.subr.mxu0 %v130
    %369 = vmatpush1.msra.mxu0 %v129
    %370 = vmatprep.subr.mxu0 %v134
    %371 = vmatpush1.msra.mxu0 %v133
    %372 = vmatprep.subr.mxu0 %v138
    %373 = vmatpush1.msra.mxu0 %v137
    %374 = vmatprep.subr.mxu0 %v142
    %375 = vmatpush1.msra.mxu0 %v141
    %376 = vmatprep.subr.mxu0 %v146
    %377 = vmatpush1.msra.mxu0 %v145
    %378 = vmatprep.subr.mxu0 %v150
    %379 = vmatpush1.msra.mxu0 %v149
    %380 = vmatprep.subr.mxu0 %v154
    %381 = vmatpush1.msra.mxu0 %v153
    %382 = vmatprep.subr.mxu0 %v158
    %383 = vmatpush1.msra.mxu0 %v157
    %384 = vmatprep.subr.mxu0 %v162
    %385 = vmatpush1.msra.mxu0 %v161
    %386 = vmatprep.subr.mxu0 %v166
    %387 = vmatpush1.msra.mxu0 %v165
    %388 = vmatprep.subr.mxu0 %v170
    %389 = vmatpush1.msra.mxu0 %v169
    %390 = vmatprep.subr.mxu0 %v174
    %391 = vmatpush1.msra.mxu0 %v173
    %392 = vmatprep.subr.mxu0 0.0
    %393 = vmatpush1.msra.mxu0 0.0
    %394 = vmatprep.subr.mxu0 0.0
    %395 = vmatpush1.msra.mxu0 0.0
    %396 = vmatprep.subr.mxu0 0.0
    %397 = vmatpush1.msra.mxu0 0.0
    %398 = vmatprep.subr.mxu0 0.0
    %399 = vmatpush1.msra.mxu0 0.0
    %400 = vmatprep.subr.mxu0 0.0
    %401 = vmatpush1.msra.mxu0 0.0
    %402 = vmatprep.subr.mxu0 0.0
    %403 = vmatpush1.msra.mxu0 0.0
    %404 = vmatprep.subr.mxu0 0.0
    %405 = vmatpush1.msra.mxu0 0.0
    %406 = vmatprep.subr.mxu0 0.0
    %407 = vmatpush1.msra.mxu0 0.0
    %408 = vmatprep.subr.mxu0 0.0
    %409 = vmatpush1.msra.mxu0 0.0
    %410 = vmatprep.subr.mxu0 0.0
    %411 = vmatpush1.msra.mxu0 0.0
    %412 = vmatprep.subr.mxu0 0.0
    %413 = vmatpush1.msra.mxu0 0.0
    %414 = vmatprep.subr.mxu0 0.0
    %415 = vmatpush1.msra.mxu0 0.0
    %416 = vmatprep.subr.mxu0 0.0
    %417 = vmatpush1.msra.mxu0 0.0
    %418 = vmatprep.subr.mxu0 0.0
    %419 = vmatpush1.msra.mxu0 0.0
    %420 = vmatprep.subr.mxu0 0.0
    %421 = vmatpush1.msra.mxu0 0.0
    %422 = vmatprep.subr.mxu0 0.0
    %423 = vmatpush1.msra.mxu0 0.0
    %424 = vmatprep.mubr.f32.mxu0 0.0
    %425 = vmatmul.mubr.f32.gmra.mrb[0].mxu0 %v110
    %v426 = vpop.f32.mrb[0].mxu0
    %v427 = vadd.f32 0.0, %v426
    %v428 = vpop.f32.mrb[0].mxu0
    %v429 = vadd.f32 0.0, %v428
    %430 = vdwg.mxu0
    %v431 = vadd.f32 %v427, %v212
    %v432 = vadd.f32 %v429, %v357
    %433 = vmatprep.subr.mxu0 %v114
    %434 = vmatpush1.msra.mxu0 %v113
    %435 = vmatprep.subr.mxu0 %v118
    %436 = vmatpush1.msra.mxu0 %v117
    %437 = vmatprep.subr.mxu0 %v122
    %438 = vmatpush1.msra.mxu0 %v121
    %439 = vmatprep.subr.mxu0 %v126
    %440 = vmatpush1.msra.mxu0 %v125
    %441 = vmatprep.subr.mxu0 %v130
    %442 = vmatpush1.msra.mxu0 %v129
    %443 = vmatprep.subr.mxu0 %v134
    %444 = vmatpush1.msra.mxu0 %v133
    %445 = vmatprep.subr.mxu0 %v138
    %446 = vmatpush1.msra.mxu0 %v137
    %447 = vmatprep.subr.mxu0 %v142
    %448 = vmatpush1.msra.mxu0 %v141
    %449 = vmatprep.subr.mxu0 %v146
    %450 = vmatpush1.msra.mxu0 %v145
    %451 = vmatprep.subr.mxu0 %v150
    %452 = vmatpush1.msra.mxu0 %v149
    %453 = vmatprep.subr.mxu0 %v154
    %454 = vmatpush1.msra.mxu0 %v153
    %455 = vmatprep.subr.mxu0 %v158
    %456 = vmatpush1.msra.mxu0 %v157
    %457 = vmatprep.subr.mxu0 %v162
    %458 = vmatpush1.msra.mxu0 %v161
    %459 = vmatprep.subr.mxu0 %v166
    %460 = vmatpush1.msra.mxu0 %v165
    %461 = vmatprep.subr.mxu0 %v170
    %462 = vmatpush1.msra.mxu0 %v169
    %463 = vmatprep.subr.mxu0 %v174
    %464 = vmatpush1.msra.mxu0 %v173
    %465 = vmatprep.subr.mxu0 0.0
    %466 = vmatpush1.msra.mxu0 0.0
    %467 = vmatprep.subr.mxu0 0.0
    %468 = vmatpush1.msra.mxu0 0.0
    %469 = vmatprep.subr.mxu0 0.0
    %470 = vmatpush1.msra.mxu0 0.0
    %471 = vmatprep.subr.mxu0 0.0
    %472 = vmatpush1.msra.mxu0 0.0
    %473 = vmatprep.subr.mxu0 0.0
    %474 = vmatpush1.msra.mxu0 0.0
    %475 = vmatprep.subr.mxu0 0.0
    %476 = vmatpush1.msra.mxu0 0.0
    %477 = vmatprep.subr.mxu0 0.0
    %478 = vmatpush1.msra.mxu0 0.0
    %479 = vmatprep.subr.mxu0 0.0
    %480 = vmatpush1.msra.mxu0 0.0
    %481 = vmatprep.subr.mxu0 0.0
    %482 = vmatpush1.msra.mxu0 0.0
    %483 = vmatprep.subr.mxu0 0.0
    %484 = vmatpush1.msra.mxu0 0.0
    %485 = vmatprep.subr.mxu0 0.0
    %486 = vmatpush1.msra.mxu0 0.0
    %487 = vmatprep.subr.mxu0 0.0
    %488 = vmatpush1.msra.mxu0 0.0
    %489 = vmatprep.subr.mxu0 0.0
    %490 = vmatpush1.msra.mxu0 0.0
    %491 = vmatprep.subr.mxu0 0.0
    %492 = vmatpush1.msra.mxu0 0.0
    %493 = vmatprep.subr.mxu0 0.0
    %494 = vmatpush1.msra.mxu0 0.0
    %495 = vmatprep.subr.mxu0 0.0
    %496 = vmatpush1.msra.mxu0 0.0
    %497 = vmatprep.mubr.f32.mxu0 0.0
    %498 = vmatmul.mubr.f32.gmra.mrb[0].mxu0 %v111
    %v499 = vpop.f32.mrb[0].mxu0
    %v500 = vadd.f32 0.0, %v499
    %v501 = vpop.f32.mrb[0].mxu0
    %v502 = vadd.f32 0.0, %v501
    %503 = vdwg.mxu0
    %v504 = vadd.f32 %v500, %v212
    %v505 = vadd.f32 %v502, %v357
    %v506 = vmul.f32 %v354, %v355
    %507 = vmatprep.subr.mxu0 0.0
    %508 = vmatpush1.msra.mxu0 %v193
    %509 = vmatprep.subr.mxu0 0.0
    %510 = vmatpush1.msra.mxu0 %v194
    %511 = vmatprep.subr.mxu0 0.0
    %512 = vmatpush1.msra.mxu0 %v195
    %513 = vmatprep.subr.mxu0 0.0
    %514 = vmatpush1.msra.mxu0 %v196
    %515 = vmatprep.subr.mxu0 0.0
    %516 = vmatpush1.msra.mxu0 %v197
    %517 = vmatprep.subr.mxu0 0.0
    %518 = vmatpush1.msra.mxu0 %v198
    %519 = vmatprep.subr.mxu0 0.0
    %520 = vmatpush1.msra.mxu0 %v199
    %521 = vmatprep.subr.mxu0 0.0
    %522 = vmatpush1.msra.mxu0 %v200
    %523 = vmatprep.subr.mxu0 0.0
    %524 = vmatpush1.msra.mxu0 %v201
    %525 = vmatprep.subr.mxu0 0.0
    %526 = vmatpush1.msra.mxu0 %v202
    %527 = vmatprep.subr.mxu0 0.0
    %528 = vmatpush1.msra.mxu0 %v203
    %529 = vmatprep.subr.mxu0 0.0
    %530 = vmatpush1.msra.mxu0 %v204
    %531 = vmatprep.subr.mxu0 0.0
    %532 = vmatpush1.msra.mxu0 %v205
    %533 = vmatprep.subr.mxu0 0.0
    %534 = vmatpush1.msra.mxu0 %v206
    %535 = vmatprep.subr.mxu0 0.0
    %536 = vmatpush1.msra.mxu0 %v207
    %537 = vmatprep.subr.mxu0 0.0
    %538 = vmatpush1.msra.mxu0 %v208
    %539 = vmatprep.subr.mxu0 0.0
    %540 = vmatpush1.msra.mxu0 0.0
    %541 = vmatprep.subr.mxu0 0.0
    %542 = vmatpush1.msra.mxu0 0.0
    %543 = vmatprep.subr.mxu0 0.0
    %544 = vmatpush1.msra.mxu0 0.0
    %545 = vmatprep.subr.mxu0 0.0
    %546 = vmatpush1.msra.mxu0 0.0
    %547 = vmatprep.subr.mxu0 0.0
    %548 = vmatpush1.msra.mxu0 0.0
    %549 = vmatprep.subr.mxu0 0.0
    %550 = vmatpush1.msra.mxu0 0.0
    %551 = vmatprep.subr.mxu0 0.0
    %552 = vmatpush1.msra.mxu0 0.0
    %553 = vmatprep.subr.mxu0 0.0
    %554 = vmatpush1.msra.mxu0 0.0
    %555 = vmatprep.subr.mxu0 0.0
    %556 = vmatpush1.msra.mxu0 0.0
    %557 = vmatprep.subr.mxu0 0.0
    %558 = vmatpush1.msra.mxu0 0.0
    %559 = vmatprep.subr.mxu0 0.0
    %560 = vmatpush1.msra.mxu0 0.0
    %561 = vmatprep.subr.mxu0 0.0
    %562 = vmatpush1.msra.mxu0 0.0
    %563 = vmatprep.subr.mxu0 0.0
    %564 = vmatpush1.msra.mxu0 0.0
    %565 = vmatprep.subr.mxu0 0.0
    %566 = vmatpush1.msra.mxu0 0.0
    %567 = vmatprep.subr.mxu0 0.0
    %568 = vmatpush1.msra.mxu0 0.0
    %569 = vmatprep.subr.mxu0 0.0
    %570 = vmatpush1.msra.mxu0 0.0
    %571 = vmatprep.mubr.f32.mxu0 0.0
    %572 = vmatmul.mubr.f32.gmra.mrb[0].mxu0 %v506
    %v573 = vpop.f32.mrb[0].mxu0
    %v574 = vadd.f32 0.0, %v573
    %v575 = vpop.f32.mrb[0].mxu0
    %576 = vdwg.mxu0
    %v577 = vmul.f32 %v574, 0.35355338
    %v578 = vmul.f32 %v354, %v431
    %579 = vmatprep.subr.mxu0 0.0
    %580 = vmatpush1.msra.mxu0 %v193
    %581 = vmatprep.subr.mxu0 0.0
    %582 = vmatpush1.msra.mxu0 %v194
    %583 = vmatprep.subr.mxu0 0.0
    %584 = vmatpush1.msra.mxu0 %v195
    %585 = vmatprep.subr.mxu0 0.0
    %586 = vmatpush1.msra.mxu0 %v196
    %587 = vmatprep.subr.mxu0 0.0
    %588 = vmatpush1.msra.mxu0 %v197
    %589 = vmatprep.subr.mxu0 0.0
    %590 = vmatpush1.msra.mxu0 %v198
    %591 = vmatprep.subr.mxu0 0.0
    %592 = vmatpush1.msra.mxu0 %v199
    %593 = vmatprep.subr.mxu0 0.0
    %594 = vmatpush1.msra.mxu0 %v200
    %595 = vmatprep.subr.mxu0 0.0
    %596 = vmatpush1.msra.mxu0 %v201
    %597 = vmatprep.subr.mxu0 0.0
    %598 = vmatpush1.msra.mxu0 %v202
    %599 = vmatprep.subr.mxu0 0.0
    %600 = vmatpush1.msra.mxu0 %v203
    %601 = vmatprep.subr.mxu0 0.0
    %602 = vmatpush1.msra.mxu0 %v204
    %603 = vmatprep.subr.mxu0 0.0
    %604 = vmatpush1.msra.mxu0 %v205
    %605 = vmatprep.subr.mxu0 0.0
    %606 = vmatpush1.msra.mxu0 %v206
    %607 = vmatprep.subr.mxu0 0.0
    %608 = vmatpush1.msra.mxu0 %v207
    %609 = vmatprep.subr.mxu0 0.0
    %610 = vmatpush1.msra.mxu0 %v208
    %611 = vmatprep.subr.mxu0 0.0
    %612 = vmatpush1.msra.mxu0 0.0
    %613 = vmatprep.subr.mxu0 0.0
    %614 = vmatpush1.msra.mxu0 0.0
    %615 = vmatprep.subr.mxu0 0.0
    %616 = vmatpush1.msra.mxu0 0.0
    %617 = vmatprep.subr.mxu0 0.0
    %618 = vmatpush1.msra.mxu0 0.0
    %619 = vmatprep.subr.mxu0 0.0
    %620 = vmatpush1.msra.mxu0 0.0
    %621 = vmatprep.subr.mxu0 0.0
    %622 = vmatpush1.msra.mxu0 0.0
    %623 = vmatprep.subr.mxu0 0.0
    %624 = vmatpush1.msra.mxu0 0.0
    %625 = vmatprep.subr.mxu0 0.0
    %626 = vmatpush1.msra.mxu0 0.0
    %627 = vmatprep.subr.mxu0 0.0
    %628 = vmatpush1.msra.mxu0 0.0
    %629 = vmatprep.subr.mxu0 0.0
    %630 = vmatpush1.msra.mxu0 0.0
    %631 = vmatprep.subr.mxu0 0.0
    %632 = vmatpush1.msra.mxu0 0.0
    %633 = vmatprep.subr.mxu0 0.0
    %634 = vmatpush1.msra.mxu0 0.0
    %635 = vmatprep.subr.mxu0 0.0
    %636 = vmatpush1.msra.mxu0 0.0
    %637 = vmatprep.subr.mxu0 0.0
    %638 = vmatpush1.msra.mxu0 0.0
    %639 = vmatprep.subr.mxu0 0.0
    %640 = vmatpush1.msra.mxu0 0.0
    %641 = vmatprep.subr.mxu0 0.0
    %642 = vmatpush1.msra.mxu0 0.0
    %643 = vmatprep.mubr.f32.mxu0 0.0
    %644 = vmatmul.mubr.f32.gmra.mrb[0].mxu0 %v578
    %v645 = vpop.f32.mrb[0].mxu0
    %v646 = vadd.f32 0.0, %v645
    %v647 = vpop.f32.mrb[0].mxu0
    %648 = vdwg.mxu0
    %v649 = vmul.f32 %v646, 0.35355338
    %v650 = vmul.f32 %v354, %v504
    %651 = vmatprep.subr.mxu0 0.0
    %652 = vmatpush1.msra.mxu0 %v193
    %653 = vmatprep.subr.mxu0 0.0
    %654 = vmatpush1.msra.mxu0 %v194
    %655 = vmatprep.subr.mxu0 0.0
    %656 = vmatpush1.msra.mxu0 %v195
    %657 = vmatprep.subr.mxu0 0.0
    %658 = vmatpush1.msra.mxu0 %v196
    %659 = vmatprep.subr.mxu0 0.0
    %660 = vmatpush1.msra.mxu0 %v197
    %661 = vmatprep.subr.mxu0 0.0
    %662 = vmatpush1.msra.mxu0 %v198
    %663 = vmatprep.subr.mxu0 0.0
    %664 = vmatpush1.msra.mxu0 %v199
    %665 = vmatprep.subr.mxu0 0.0
    %666 = vmatpush1.msra.mxu0 %v200
    %667 = vmatprep.subr.mxu0 0.0
    %668 = vmatpush1.msra.mxu0 %v201
    %669 = vmatprep.subr.mxu0 0.0
    %670 = vmatpush1.msra.mxu0 %v202
    %671 = vmatprep.subr.mxu0 0.0
    %672 = vmatpush1.msra.mxu0 %v203
    %673 = vmatprep.subr.mxu0 0.0
    %674 = vmatpush1.msra.mxu0 %v204
    %675 = vmatprep.subr.mxu0 0.0
    %676 = vmatpush1.msra.mxu0 %v205
    %677 = vmatprep.subr.mxu0 0.0
    %678 = vmatpush1.msra.mxu0 %v206
    %679 = vmatprep.subr.mxu0 0.0
    %680 = vmatpush1.msra.mxu0 %v207
    %681 = vmatprep.subr.mxu0 0.0
    %682 = vmatpush1.msra.mxu0 %v208
    %683 = vmatprep.subr.mxu0 0.0
    %684 = vmatpush1.msra.mxu0 0.0
    %685 = vmatprep.subr.mxu0 0.0
    %686 = vmatpush1.msra.mxu0 0.0
    %687 = vmatprep.subr.mxu0 0.0
    %688 = vmatpush1.msra.mxu0 0.0
    %689 = vmatprep.subr.mxu0 0.0
    %690 = vmatpush1.msra.mxu0 0.0
    %691 = vmatprep.subr.mxu0 0.0
    %692 = vmatpush1.msra.mxu0 0.0
    %693 = vmatprep.subr.mxu0 0.0
    %694 = vmatpush1.msra.mxu0 0.0
    %695 = vmatprep.subr.mxu0 0.0
    %696 = vmatpush1.msra.mxu0 0.0
    %697 = vmatprep.subr.mxu0 0.0
    %698 = vmatpush1.msra.mxu0 0.0
    %699 = vmatprep.subr.mxu0 0.0
    %700 = vmatpush1.msra.mxu0 0.0
    %701 = vmatprep.subr.mxu0 0.0
    %702 = vmatpush1.msra.mxu0 0.0
    %703 = vmatprep.subr.mxu0 0.0
    %704 = vmatpush1.msra.mxu0 0.0
    %705 = vmatprep.subr.mxu0 0.0
    %706 = vmatpush1.msra.mxu0 0.0
    %707 = vmatprep.subr.mxu0 0.0
    %708 = vmatpush1.msra.mxu0 0.0
    %709 = vmatprep.subr.mxu0 0.0
    %710 = vmatpush1.msra.mxu0 0.0
    %711 = vmatprep.subr.mxu0 0.0
    %712 = vmatpush1.msra.mxu0 0.0
    %713 = vmatprep.subr.mxu0 0.0
    %714 = vmatpush1.msra.mxu0 0.0
    %715 = vmatprep.mubr.f32.mxu0 0.0
    %716 = vmatmul.mubr.f32.gmra.mrb[0].mxu0 %v650
    %v717 = vpop.f32.mrb[0].mxu0
    %v718 = vadd.f32 0.0, %v717
    %v719 = vpop.f32.mrb[0].mxu0
    %720 = vdwg.mxu0
    %v721 = vmul.f32 %v718, 0.35355338
    %v722 = vmax.f32 %v577, %v649
    %v723 = vmax.f32 %v722, %v721
    %v724 = vsub.f32 %v577, %v723
    %v725 = vmul.f32 %v724, 1.442695
    %v726 = vpow.pop %v725
    %v727 = vsub.f32 %v649, %v723
    %v728 = vmul.f32 %v727, 1.442695
    %v729 = vpow.pop %v728
    %v730 = vsub.f32 %v721, %v723
    %v731 = vmul.f32 %v730, 1.442695
    %v732 = vpow.pop %v731
    %v733 = vadd.f32 %v726, %v729
    %v734 = vadd.f32 %v733, %v732
    %v735 = vrcp.pop %v734
    %v736 = vmul.f32 %v726, %v735
    %vm737 = vcmask 130048
    %v739 = vsel %vm737, %v736, 0
    %741 = vmatprep.subr.mxu0 0.0
    %742 = vmatpush1.msra.mxu0 %v209
    %743 = vmatprep.subr.mxu0 0.0
    %744 = vmatpush1.msra.mxu0 %v210
    %745 = vmatprep.subr.mxu0 0.0
    %746 = vmatpush1.msra.mxu0 0.0
    %747 = vmatprep.subr.mxu0 0.0
    %748 = vmatpush1.msra.mxu0 0.0
    %749 = vmatprep.subr.mxu0 0.0
    %750 = vmatpush1.msra.mxu0 0.0
    %751 = vmatprep.subr.mxu0 0.0
    %752 = vmatpush1.msra.mxu0 0.0
    %753 = vmatprep.subr.mxu0 0.0
    %754 = vmatpush1.msra.mxu0 0.0
    %755 = vmatprep.subr.mxu0 0.0
    %756 = vmatpush1.msra.mxu0 0.0
    %757 = vmatprep.subr.mxu0 0.0
    %758 = vmatpush1.msra.mxu0 0.0
    %759 = vmatprep.subr.mxu0 0.0
    %760 = vmatpush1.msra.mxu0 0.0
    %761 = vmatprep.subr.mxu0 0.0
    %762 = vmatpush1.msra.mxu0 0.0
    %763 = vmatprep.subr.mxu0 0.0
    %764 = vmatpush1.msra.mxu0 0.0
    %765 = vmatprep.subr.mxu0 0.0
    %766 = vmatpush1.msra.mxu0 0.0
    %767 = vmatprep.subr.mxu0 0.0
    %768 = vmatpush1.msra.mxu0 0.0
    %769 = vmatprep.subr.mxu0 0.0
    %770 = vmatpush1.msra.mxu0 0.0
    %771 = vmatprep.subr.mxu0 0.0
    %772 = vmatpush1.msra.mxu0 0.0
    %773 = vmatprep.subr.mxu0 0.0
    %774 = vmatpush1.msra.mxu0 0.0
    %775 = vmatprep.subr.mxu0 0.0
    %776 = vmatpush1.msra.mxu0 0.0
    %777 = vmatprep.subr.mxu0 0.0
    %778 = vmatpush1.msra.mxu0 0.0
    %779 = vmatprep.subr.mxu0 0.0
    %780 = vmatpush1.msra.mxu0 0.0
    %781 = vmatprep.subr.mxu0 0.0
    %782 = vmatpush1.msra.mxu0 0.0
    %783 = vmatprep.subr.mxu0 0.0
    %784 = vmatpush1.msra.mxu0 0.0
    %785 = vmatprep.subr.mxu0 0.0
    %786 = vmatpush1.msra.mxu0 0.0
    %787 = vmatprep.subr.mxu0 0.0
    %788 = vmatpush1.msra.mxu0 0.0
    %789 = vmatprep.subr.mxu0 0.0
    %790 = vmatpush1.msra.mxu0 0.0
    %791 = vmatprep.subr.mxu0 0.0
    %792 = vmatpush1.msra.mxu0 0.0
    %793 = vmatprep.subr.mxu0 0.0
    %794 = vmatpush1.msra.mxu0 0.0
    %795 = vmatprep.subr.mxu0 0.0
    %796 = vmatpush1.msra.mxu0 0.0
    %797 = vmatprep.subr.mxu0 0.0
    %798 = vmatpush1.msra.mxu0 0.0
    %799 = vmatprep.subr.mxu0 0.0
    %800 = vmatpush1.msra.mxu0 0.0
    %801 = vmatprep.subr.mxu0 0.0
    %802 = vmatpush1.msra.mxu0 0.0
    %803 = vmatprep.subr.mxu0 0.0
    %804 = vmatpush1.msra.mxu0 0.0
    %805 = vmatprep.mubr.f32.mxu0 0.0
    %806 = vmatmul.mubr.f32.gmra.mrb[0].mxu0 %v739
    %v807 = vpop.f32.mrb[0].mxu0
    %v808 = vadd.f32 0.0, %v807
    %v809 = vpop.f32.mrb[0].mxu0
    %810 = vdwg.mxu0
    %v811 = vmul.f32 %v808, %v359
    %v812 = vmul.f32 %v729, %v735
    %v814 = vsel %vm737, %v812, 0
    %816 = vmatprep.subr.mxu0 0.0
    %817 = vmatpush1.msra.mxu0 %v209
    %818 = vmatprep.subr.mxu0 0.0
    %819 = vmatpush1.msra.mxu0 %v210
    %820 = vmatprep.subr.mxu0 0.0
    %821 = vmatpush1.msra.mxu0 0.0
    %822 = vmatprep.subr.mxu0 0.0
    %823 = vmatpush1.msra.mxu0 0.0
    %824 = vmatprep.subr.mxu0 0.0
    %825 = vmatpush1.msra.mxu0 0.0
    %826 = vmatprep.subr.mxu0 0.0
    %827 = vmatpush1.msra.mxu0 0.0
    %828 = vmatprep.subr.mxu0 0.0
    %829 = vmatpush1.msra.mxu0 0.0
    %830 = vmatprep.subr.mxu0 0.0
    %831 = vmatpush1.msra.mxu0 0.0
    %832 = vmatprep.subr.mxu0 0.0
    %833 = vmatpush1.msra.mxu0 0.0
    %834 = vmatprep.subr.mxu0 0.0
    %835 = vmatpush1.msra.mxu0 0.0
    %836 = vmatprep.subr.mxu0 0.0
    %837 = vmatpush1.msra.mxu0 0.0
    %838 = vmatprep.subr.mxu0 0.0
    %839 = vmatpush1.msra.mxu0 0.0
    %840 = vmatprep.subr.mxu0 0.0
    %841 = vmatpush1.msra.mxu0 0.0
    %842 = vmatprep.subr.mxu0 0.0
    %843 = vmatpush1.msra.mxu0 0.0
    %844 = vmatprep.subr.mxu0 0.0
    %845 = vmatpush1.msra.mxu0 0.0
    %846 = vmatprep.subr.mxu0 0.0
    %847 = vmatpush1.msra.mxu0 0.0
    %848 = vmatprep.subr.mxu0 0.0
    %849 = vmatpush1.msra.mxu0 0.0
    %850 = vmatprep.subr.mxu0 0.0
    %851 = vmatpush1.msra.mxu0 0.0
    %852 = vmatprep.subr.mxu0 0.0
    %853 = vmatpush1.msra.mxu0 0.0
    %854 = vmatprep.subr.mxu0 0.0
    %855 = vmatpush1.msra.mxu0 0.0
    %856 = vmatprep.subr.mxu0 0.0
    %857 = vmatpush1.msra.mxu0 0.0
    %858 = vmatprep.subr.mxu0 0.0
    %859 = vmatpush1.msra.mxu0 0.0
    %860 = vmatprep.subr.mxu0 0.0
    %861 = vmatpush1.msra.mxu0 0.0
    %862 = vmatprep.subr.mxu0 0.0
    %863 = vmatpush1.msra.mxu0 0.0
    %864 = vmatprep.subr.mxu0 0.0
    %865 = vmatpush1.msra.mxu0 0.0
    %866 = vmatprep.subr.mxu0 0.0
    %867 = vmatpush1.msra.mxu0 0.0
    %868 = vmatprep.subr.mxu0 0.0
    %869 = vmatpush1.msra.mxu0 0.0
    %870 = vmatprep.subr.mxu0 0.0
    %871 = vmatpush1.msra.mxu0 0.0
    %872 = vmatprep.subr.mxu0 0.0
    %873 = vmatpush1.msra.mxu0 0.0
    %874 = vmatprep.subr.mxu0 0.0
    %875 = vmatpush1.msra.mxu0 0.0
    %876 = vmatprep.subr.mxu0 0.0
    %877 = vmatpush1.msra.mxu0 0.0
    %878 = vmatprep.subr.mxu0 0.0
    %879 = vmatpush1.msra.mxu0 0.0
    %880 = vmatprep.mubr.f32.mxu0 0.0
    %881 = vmatmul.mubr.f32.gmra.mrb[0].mxu0 %v814
    %v882 = vpop.f32.mrb[0].mxu0
    %v883 = vadd.f32 0.0, %v882
    %v884 = vpop.f32.mrb[0].mxu0
    %885 = vdwg.mxu0
    %v886 = vmul.f32 %v883, %v432
    %v887 = vadd.f32 %v811, %v886
    %v888 = vmul.f32 %v732, %v735
    %v890 = vsel %vm737, %v888, 0
    %892 = vmatprep.subr.mxu0 0.0
    %893 = vmatpush1.msra.mxu0 %v209
    %894 = vmatprep.subr.mxu0 0.0
    %895 = vmatpush1.msra.mxu0 %v210
    %896 = vmatprep.subr.mxu0 0.0
    %897 = vmatpush1.msra.mxu0 0.0
    %898 = vmatprep.subr.mxu0 0.0
    %899 = vmatpush1.msra.mxu0 0.0
    %900 = vmatprep.subr.mxu0 0.0
    %901 = vmatpush1.msra.mxu0 0.0
    %902 = vmatprep.subr.mxu0 0.0
    %903 = vmatpush1.msra.mxu0 0.0
    %904 = vmatprep.subr.mxu0 0.0
    %905 = vmatpush1.msra.mxu0 0.0
    %906 = vmatprep.subr.mxu0 0.0
    %907 = vmatpush1.msra.mxu0 0.0
    %908 = vmatprep.subr.mxu0 0.0
    %909 = vmatpush1.msra.mxu0 0.0
    %910 = vmatprep.subr.mxu0 0.0
    %911 = vmatpush1.msra.mxu0 0.0
    %912 = vmatprep.subr.mxu0 0.0
    %913 = vmatpush1.msra.mxu0 0.0
    %914 = vmatprep.subr.mxu0 0.0
    %915 = vmatpush1.msra.mxu0 0.0
    %916 = vmatprep.subr.mxu0 0.0
    %917 = vmatpush1.msra.mxu0 0.0
    %918 = vmatprep.subr.mxu0 0.0
    %919 = vmatpush1.msra.mxu0 0.0
    %920 = vmatprep.subr.mxu0 0.0
    %921 = vmatpush1.msra.mxu0 0.0
    %922 = vmatprep.subr.mxu0 0.0
    %923 = vmatpush1.msra.mxu0 0.0
    %924 = vmatprep.subr.mxu0 0.0
    %925 = vmatpush1.msra.mxu0 0.0
    %926 = vmatprep.subr.mxu0 0.0
    %927 = vmatpush1.msra.mxu0 0.0
    %928 = vmatprep.subr.mxu0 0.0
    %929 = vmatpush1.msra.mxu0 0.0
    %930 = vmatprep.subr.mxu0 0.0
    %931 = vmatpush1.msra.mxu0 0.0
    %932 = vmatprep.subr.mxu0 0.0
    %933 = vmatpush1.msra.mxu0 0.0
    %934 = vmatprep.subr.mxu0 0.0
    %935 = vmatpush1.msra.mxu0 0.0
    %936 = vmatprep.subr.mxu0 0.0
    %937 = vmatpush1.msra.mxu0 0.0
    %938 = vmatprep.subr.mxu0 0.0
    %939 = vmatpush1.msra.mxu0 0.0
    %940 = vmatprep.subr.mxu0 0.0
    %941 = vmatpush1.msra.mxu0 0.0
    %942 = vmatprep.subr.mxu0 0.0
    %943 = vmatpush1.msra.mxu0 0.0
    %944 = vmatprep.subr.mxu0 0.0
    %945 = vmatpush1.msra.mxu0 0.0
    %946 = vmatprep.subr.mxu0 0.0
    %947 = vmatpush1.msra.mxu0 0.0
    %948 = vmatprep.subr.mxu0 0.0
    %949 = vmatpush1.msra.mxu0 0.0
    %950 = vmatprep.subr.mxu0 0.0
    %951 = vmatpush1.msra.mxu0 0.0
    %952 = vmatprep.subr.mxu0 0.0
    %953 = vmatpush1.msra.mxu0 0.0
    %954 = vmatprep.subr.mxu0 0.0
    %955 = vmatpush1.msra.mxu0 0.0
    %956 = vmatprep.mubr.f32.mxu0 0.0
    %957 = vmatmul.mubr.f32.gmra.mrb[0].mxu0 %v890
    %v958 = vpop.f32.mrb[0].mxu0
    %v959 = vadd.f32 0.0, %v958
    %v960 = vpop.f32.mrb[0].mxu0
    %961 = vdwg.mxu0
    %v962 = vmul.f32 %v959, %v505
    %v963 = vadd.f32 %v887, %v962
    %v965 = vrot.slane %v212, 1
    %967 = vmatprep.subr.mxu0 0.0
    %968 = vmatpush1.msra.mxu0 %v115
    %969 = vmatprep.subr.mxu0 0.0
    %970 = vmatpush1.msra.mxu0 %v119
    %971 = vmatprep.subr.mxu0 0.0
    %972 = vmatpush1.msra.mxu0 %v123
    %973 = vmatprep.subr.mxu0 0.0
    %974 = vmatpush1.msra.mxu0 %v127
    %975 = vmatprep.subr.mxu0 0.0
    %976 = vmatpush1.msra.mxu0 %v131
    %977 = vmatprep.subr.mxu0 0.0
    %978 = vmatpush1.msra.mxu0 %v135
    %979 = vmatprep.subr.mxu0 0.0
    %980 = vmatpush1.msra.mxu0 %v139
    %981 = vmatprep.subr.mxu0 0.0
    %982 = vmatpush1.msra.mxu0 %v143
    %983 = vmatprep.subr.mxu0 0.0
    %984 = vmatpush1.msra.mxu0 %v147
    %985 = vmatprep.subr.mxu0 0.0
    %986 = vmatpush1.msra.mxu0 %v151
    %987 = vmatprep.subr.mxu0 0.0
    %988 = vmatpush1.msra.mxu0 %v155
    %989 = vmatprep.subr.mxu0 0.0
    %990 = vmatpush1.msra.mxu0 %v159
    %991 = vmatprep.subr.mxu0 0.0
    %992 = vmatpush1.msra.mxu0 %v163
    %993 = vmatprep.subr.mxu0 0.0
    %994 = vmatpush1.msra.mxu0 %v167
    %995 = vmatprep.subr.mxu0 0.0
    %996 = vmatpush1.msra.mxu0 %v171
    %997 = vmatprep.subr.mxu0 0.0
    %998 = vmatpush1.msra.mxu0 %v175
    %999 = vmatprep.subr.mxu0 0.0
    %1000 = vmatpush1.msra.mxu0 0.0
    %1001 = vmatprep.subr.mxu0 0.0
    %1002 = vmatpush1.msra.mxu0 0.0
    %1003 = vmatprep.subr.mxu0 0.0
    %1004 = vmatpush1.msra.mxu0 0.0
    %1005 = vmatprep.subr.mxu0 0.0
    %1006 = vmatpush1.msra.mxu0 0.0
    %1007 = vmatprep.subr.mxu0 0.0
    %1008 = vmatpush1.msra.mxu0 0.0
    %1009 = vmatprep.subr.mxu0 0.0
    %1010 = vmatpush1.msra.mxu0 0.0
    %1011 = vmatprep.subr.mxu0 0.0
    %1012 = vmatpush1.msra.mxu0 0.0
    %1013 = vmatprep.subr.mxu0 0.0
    %1014 = vmatpush1.msra.mxu0 0.0
    %1015 = vmatprep.subr.mxu0 0.0
    %1016 = vmatpush1.msra.mxu0 0.0
    %1017 = vmatprep.subr.mxu0 0.0
    %1018 = vmatpush1.msra.mxu0 0.0
    %1019 = vmatprep.subr.mxu0 0.0
    %1020 = vmatpush1.msra.mxu0 0.0
    %1021 = vmatprep.subr.mxu0 0.0
    %1022 = vmatpush1.msra.mxu0 0.0
    %1023 = vmatprep.subr.mxu0 0.0
    %1024 = vmatpush1.msra.mxu0 0.0
    %1025 = vmatprep.subr.mxu0 0.0
    %1026 = vmatpush1.msra.mxu0 0.0
    %1027 = vmatprep.subr.mxu0 0.0
    %1028 = vmatpush1.msra.mxu0 0.0
    %1029 = vmatprep.subr.mxu0 0.0
    %1030 = vmatpush1.msra.mxu0 0.0
    %1031 = vmatprep.mubr.f32.mxu0 0.0
    %1032 = vmatmul.mubr.f32.gmra.mrb[0].mxu0 %v963
    %v1033 = vpop.f32.mrb[0].mxu0
    %v1034 = vadd.f32 %v965, %v1033
    %v1035 = vpop.f32.mrb[0].mxu0
    %1036 = vdwg.mxu0
    %v1037 = vadd.f32 %v109, %v1034
    %1038 = vmatprep.subr.mxu0 0.0
    %1039 = vmatpush1.msra.mxu0 %v176
    %1040 = vmatprep.subr.mxu0 0.0
    %1041 = vmatpush1.msra.mxu0 %v177
    %1042 = vmatprep.subr.mxu0 0.0
    %1043 = vmatpush1.msra.mxu0 %v178
    %1044 = vmatprep.subr.mxu0 0.0
    %1045 = vmatpush1.msra.mxu0 %v179
    %1046 = vmatprep.subr.mxu0 0.0
    %1047 = vmatpush1.msra.mxu0 %v180
    %1048 = vmatprep.subr.mxu0 0.0
    %1049 = vmatpush1.msra.mxu0 %v181
    %1050 = vmatprep.subr.mxu0 0.0
    %1051 = vmatpush1.msra.mxu0 %v182
    %1052 = vmatprep.subr.mxu0 0.0
    %1053 = vmatpush1.msra.mxu0 %v183
    %1054 = vmatprep.subr.mxu0 0.0
    %1055 = vmatpush1.msra.mxu0 %v184
    %1056 = vmatprep.subr.mxu0 0.0
    %1057 = vmatpush1.msra.mxu0 %v185
    %1058 = vmatprep.subr.mxu0 0.0
    %1059 = vmatpush1.msra.mxu0 %v186
    %1060 = vmatprep.subr.mxu0 0.0
    %1061 = vmatpush1.msra.mxu0 %v187
    %1062 = vmatprep.subr.mxu0 0.0
    %1063 = vmatpush1.msra.mxu0 %v188
    %1064 = vmatprep.subr.mxu0 0.0
    %1065 = vmatpush1.msra.mxu0 %v189
    %1066 = vmatprep.subr.mxu0 0.0
    %1067 = vmatpush1.msra.mxu0 %v190
    %1068 = vmatprep.subr.mxu0 0.0
    %1069 = vmatpush1.msra.mxu0 %v191
    %1070 = vmatprep.subr.mxu0 0.0
    %1071 = vmatpush1.msra.mxu0 0.0
    %1072 = vmatprep.subr.mxu0 0.0
    %1073 = vmatpush1.msra.mxu0 0.0
    %1074 = vmatprep.subr.mxu0 0.0
    %1075 = vmatpush1.msra.mxu0 0.0
    %1076 = vmatprep.subr.mxu0 0.0
    %1077 = vmatpush1.msra.mxu0 0.0
    %1078 = vmatprep.subr.mxu0 0.0
    %1079 = vmatpush1.msra.mxu0 0.0
    %1080 = vmatprep.subr.mxu0 0.0
    %1081 = vmatpush1.msra.mxu0 0.0
    %1082 = vmatprep.subr.mxu0 0.0
    %1083 = vmatpush1.msra.mxu0 0.0
    %1084 = vmatprep.subr.mxu0 0.0
    %1085 = vmatpush1.msra.mxu0 0.0
    %1086 = vmatprep.subr.mxu0 0.0
    %1087 = vmatpush1.msra.mxu0 0.0
    %1088 = vmatprep.subr.mxu0 0.0
    %1089 = vmatpush1.msra.mxu0 0.0
    %1090 = vmatprep.subr.mxu0 0.0
    %1091 = vmatpush1.msra.mxu0 0.0
    %1092 = vmatprep.subr.mxu0 0.0
    %1093 = vmatpush1.msra.mxu0 0.0
    %1094 = vmatprep.subr.mxu0 0.0
    %1095 = vmatpush1.msra.mxu0 0.0
    %1096 = vmatprep.subr.mxu0 0.0
    %1097 = vmatpush1.msra.mxu0 0.0
    %1098 = vmatprep.subr.mxu0 0.0
    %1099 = vmatpush1.msra.mxu0 0.0
    %1100 = vmatprep.subr.mxu0 0.0
    %1101 = vmatpush1.msra.mxu0 0.0
    %1102 = vmatprep.mubr.f32.mxu0 0.0
    %1103 = vmatmul.mubr.f32.gmra.mrb[0].mxu0 %v1037
    %v1104 = vpop.f32.mrb[0].mxu0
    %v1105 = vadd.f32 0.0, %v1104
    %v1106 = vpop.f32.mrb[0].mxu0
    %1107 = vdwg.mxu0
    %v1108 = vmul.f32 %v1105, 0.03125
    %vm1109 = vcmask 31744
    %v1111 = vsel %vm1109, %v1108, 0
    %vm1113 = vcmask 1043456
    %v1115 = vsel %vm1113, %v192, 0
    %1117 = vmatprep.subr.mxu0 0.0
    %1118 = vmatpush1.msra.mxu0 %v1115
    %1119 = vmatprep.subr.mxu0 0.0
    %1120 = vmatpush1.msra.mxu0 0.0
    %1121 = vmatprep.subr.mxu0 0.0
    %1122 = vmatpush1.msra.mxu0 0.0
    %1123 = vmatprep.subr.mxu0 0.0
    %1124 = vmatpush1.msra.mxu0 0.0
    %1125 = vmatprep.subr.mxu0 0.0
    %1126 = vmatpush1.msra.mxu0 0.0
    %1127 = vmatprep.subr.mxu0 0.0
    %1128 = vmatpush1.msra.mxu0 0.0
    %1129 = vmatprep.subr.mxu0 0.0
    %1130 = vmatpush1.msra.mxu0 0.0
    %1131 = vmatprep.subr.mxu0 0.0
    %1132 = vmatpush1.msra.mxu0 0.0
    %1133 = vmatprep.subr.mxu0 0.0
    %1134 = vmatpush1.msra.mxu0 0.0
    %1135 = vmatprep.subr.mxu0 0.0
    %1136 = vmatpush1.msra.mxu0 0.0
    %1137 = vmatprep.subr.mxu0 0.0
    %1138 = vmatpush1.msra.mxu0 0.0
    %1139 = vmatprep.subr.mxu0 0.0
    %1140 = vmatpush1.msra.mxu0 0.0
    %1141 = vmatprep.subr.mxu0 0.0
    %1142 = vmatpush1.msra.mxu0 0.0
    %1143 = vmatprep.subr.mxu0 0.0
    %1144 = vmatpush1.msra.mxu0 0.0
    %1145 = vmatprep.subr.mxu0 0.0
    %1146 = vmatpush1.msra.mxu0 0.0
    %1147 = vmatprep.subr.mxu0 0.0
    %1148 = vmatpush1.msra.mxu0 0.0
    %1149 = vmatprep.subr.mxu0 0.0
    %1150 = vmatpush1.msra.mxu0 0.0
    %1151 = vmatprep.subr.mxu0 0.0
    %1152 = vmatpush1.msra.mxu0 0.0
    %1153 = vmatprep.subr.mxu0 0.0
    %1154 = vmatpush1.msra.mxu0 0.0
    %1155 = vmatprep.subr.mxu0 0.0
    %1156 = vmatpush1.msra.mxu0 0.0
    %1157 = vmatprep.subr.mxu0 0.0
    %1158 = vmatpush1.msra.mxu0 0.0
    %1159 = vmatprep.subr.mxu0 0.0
    %1160 = vmatpush1.msra.mxu0 0.0
    %1161 = vmatprep.subr.mxu0 0.0
    %1162 = vmatpush1.msra.mxu0 0.0
    %1163 = vmatprep.subr.mxu0 0.0
    %1164 = vmatpush1.msra.mxu0 0.0
    %1165 = vmatprep.subr.mxu0 0.0
    %1166 = vmatpush1.msra.mxu0 0.0
    %1167 = vmatprep.subr.mxu0 0.0
    %1168 = vmatpush1.msra.mxu0 0.0
    %1169 = vmatprep.subr.mxu0 0.0
    %1170 = vmatpush1.msra.mxu0 0.0
    %1171 = vmatprep.subr.mxu0 0.0
    %1172 = vmatpush1.msra.mxu0 0.0
    %1173 = vmatprep.subr.mxu0 0.0
    %1174 = vmatpush1.msra.mxu0 0.0
    %1175 = vmatprep.subr.mxu0 0.0
    %1176 = vmatpush1.msra.mxu0 0.0
    %1177 = vmatprep.subr.mxu0 0.0
    %1178 = vmatpush1.msra.mxu0 0.0
    %1179 = vmatprep.subr.mxu0 0.0
    %1180 = vmatpush1.msra.mxu0 0.0
    %1181 = vmatprep.mubr.f32.mxu0 0.0
    %1182 = vmatmul.mubr.f32.gmra.mrb[0].mxu0 %v1111
    %v1183 = vpop.f32.mrb[0].mxu0
    %v1184 = vadd.f32 0.0, %v1183
    %v1185 = vpop.f32.mrb[0].mxu0
    %1186 = vdwg.mxu0
    %v1187 = vsub.f32 %v1037, %v1184
    %v1188 = vmul.f32 %v1187, %v1187
    %1189 = vmatprep.subr.mxu0 0.0
    %1190 = vmatpush1.msra.mxu0 %v176
    %1191 = vmatprep.subr.mxu0 0.0
    %1192 = vmatpush1.msra.mxu0 %v177
    %1193 = vmatprep.subr.mxu0 0.0
    %1194 = vmatpush1.msra.mxu0 %v178
    %1195 = vmatprep.subr.mxu0 0.0
    %1196 = vmatpush1.msra.mxu0 %v179
    %1197 = vmatprep.subr.mxu0 0.0
    %1198 = vmatpush1.msra.mxu0 %v180
    %1199 = vmatprep.subr.mxu0 0.0
    %1200 = vmatpush1.msra.mxu0 %v181
    %1201 = vmatprep.subr.mxu0 0.0
    %1202 = vmatpush1.msra.mxu0 %v182
    %1203 = vmatprep.subr.mxu0 0.0
    %1204 = vmatpush1.msra.mxu0 %v183
    %1205 = vmatprep.subr.mxu0 0.0
    %1206 = vmatpush1.msra.mxu0 %v184
    %1207 = vmatprep.subr.mxu0 0.0
    %1208 = vmatpush1.msra.mxu0 %v185
    %1209 = vmatprep.subr.mxu0 0.0
    %1210 = vmatpush1.msra.mxu0 %v186
    %1211 = vmatprep.subr.mxu0 0.0
    %1212 = vmatpush1.msra.mxu0 %v187
    %1213 = vmatprep.subr.mxu0 0.0
    %1214 = vmatpush1.msra.mxu0 %v188
    %1215 = vmatprep.subr.mxu0 0.0
    %1216 = vmatpush1.msra.mxu0 %v189
    %1217 = vmatprep.subr.mxu0 0.0
    %1218 = vmatpush1.msra.mxu0 %v190
    %1219 = vmatprep.subr.mxu0 0.0
    %1220 = vmatpush1.msra.mxu0 %v191
    %1221 = vmatprep.subr.mxu0 0.0
    %1222 = vmatpush1.msra.mxu0 0.0
    %1223 = vmatprep.subr.mxu0 0.0
    %1224 = vmatpush1.msra.mxu0 0.0
    %1225 = vmatprep.subr.mxu0 0.0
    %1226 = vmatpush1.msra.mxu0 0.0
    %1227 = vmatprep.subr.mxu0 0.0
    %1228 = vmatpush1.msra.mxu0 0.0
    %1229 = vmatprep.subr.mxu0 0.0
    %1230 = vmatpush1.msra.mxu0 0.0
    %1231 = vmatprep.subr.mxu0 0.0
    %1232 = vmatpush1.msra.mxu0 0.0
    %1233 = vmatprep.subr.mxu0 0.0
    %1234 = vmatpush1.msra.mxu0 0.0
    %1235 = vmatprep.subr.mxu0 0.0
    %1236 = vmatpush1.msra.mxu0 0.0
    %1237 = vmatprep.subr.mxu0 0.0
    %1238 = vmatpush1.msra.mxu0 0.0
    %1239 = vmatprep.subr.mxu0 0.0
    %1240 = vmatpush1.msra.mxu0 0.0
    %1241 = vmatprep.subr.mxu0 0.0
    %1242 = vmatpush1.msra.mxu0 0.0
    %1243 = vmatprep.subr.mxu0 0.0
    %1244 = vmatpush1.msra.mxu0 0.0
    %1245 = vmatprep.subr.mxu0 0.0
    %1246 = vmatpush1.msra.mxu0 0.0
    %1247 = vmatprep.subr.mxu0 0.0
    %1248 = vmatpush1.msra.mxu0 0.0
    %1249 = vmatprep.subr.mxu0 0.0
    %1250 = vmatpush1.msra.mxu0 0.0
    %1251 = vmatprep.subr.mxu0 0.0
    %1252 = vmatpush1.msra.mxu0 0.0
    %1253 = vmatprep.mubr.f32.mxu0 0.0
    %1254 = vmatmul.mubr.f32.gmra.mrb[0].mxu0 %v1188
    %v1255 = vpop.f32.mrb[0].mxu0
    %v1256 = vadd.f32 0.0, %v1255
    %v1257 = vpop.f32.mrb[0].mxu0
    %1258 = vdwg.mxu0
    %v1259 = vmul.f32 %v1256, 0.03125
    %v1260 = vadd.f32 %v1259, 1e-05
    %v1261 = vrsqrt.pop %v1260
    %v1263 = vsel %vm1109, %v1261, 0
    %1265 = vmatprep.subr.mxu0 0.0
    %1266 = vmatpush1.msra.mxu0 %v1115
    %1267 = vmatprep.subr.mxu0 0.0
    %1268 = vmatpush1.msra.mxu0 0.0
    %1269 = vmatprep.subr.mxu0 0.0
    %1270 = vmatpush1.msra.mxu0 0.0
    %1271 = vmatprep.subr.mxu0 0.0
    %1272 = vmatpush1.msra.mxu0 0.0
    %1273 = vmatprep.subr.mxu0 0.0
    %1274 = vmatpush1.msra.mxu0 0.0
    %1275 = vmatprep.subr.mxu0 0.0
    %1276 = vmatpush1.msra.mxu0 0.0
    %1277 = vmatprep.subr.mxu0 0.0
    %1278 = vmatpush1.msra.mxu0 0.0
    %1279 = vmatprep.subr.mxu0 0.0
    %1280 = vmatpush1.msra.mxu0 0.0
    %1281 = vmatprep.subr.mxu0 0.0
    %1282 = vmatpush1.msra.mxu0 0.0
    %1283 = vmatprep.subr.mxu0 0.0
    %1284 = vmatpush1.msra.mxu0 0.0
    %1285 = vmatprep.subr.mxu0 0.0
    %1286 = vmatpush1.msra.mxu0 0.0
    %1287 = vmatprep.subr.mxu0 0.0
    %1288 = vmatpush1.msra.mxu0 0.0
    %1289 = vmatprep.subr.mxu0 0.0
    %1290 = vmatpush1.msra.mxu0 0.0
    %1291 = vmatprep.subr.mxu0 0.0
    %1292 = vmatpush1.msra.mxu0 0.0
    %1293 = vmatprep.subr.mxu0 0.0
    %1294 = vmatpush1.msra.mxu0 0.0
    %1295 = vmatprep.subr.mxu0 0.0
    %1296 = vmatpush1.msra.mxu0 0.0
    %1297 = vmatprep.subr.mxu0 0.0
    %1298 = vmatpush1.msra.mxu0 0.0
    %1299 = vmatprep.subr.mxu0 0.0
    %1300 = vmatpush1.msra.mxu0 0.0
    %1301 = vmatprep.subr.mxu0 0.0
    %1302 = vmatpush1.msra.mxu0 0.0
    %1303 = vmatprep.subr.mxu0 0.0
    %1304 = vmatpush1.msra.mxu0 0.0
    %1305 = vmatprep.subr.mxu0 0.0
    %1306 = vmatpush1.msra.mxu0 0.0
    %1307 = vmatprep.subr.mxu0 0.0
    %1308 = vmatpush1.msra.mxu0 0.0
    %1309 = vmatprep.subr.mxu0 0.0
    %1310 = vmatpush1.msra.mxu0 0.0
    %1311 = vmatprep.subr.mxu0 0.0
    %1312 = vmatpush1.msra.mxu0 0.0
    %1313 = vmatprep.subr.mxu0 0.0
    %1314 = vmatpush1.msra.mxu0 0.0
    %1315 = vmatprep.subr.mxu0 0.0
    %1316 = vmatpush1.msra.mxu0 0.0
    %1317 = vmatprep.subr.mxu0 0.0
    %1318 = vmatpush1.msra.mxu0 0.0
    %1319 = vmatprep.subr.mxu0 0.0
    %1320 = vmatpush1.msra.mxu0 0.0
    %1321 = vmatprep.subr.mxu0 0.0
    %1322 = vmatpush1.msra.mxu0 0.0
    %1323 = vmatprep.subr.mxu0 0.0
    %1324 = vmatpush1.msra.mxu0 0.0
    %1325 = vmatprep.subr.mxu0 0.0
    %1326 = vmatpush1.msra.mxu0 0.0
    %1327 = vmatprep.subr.mxu0 0.0
    %1328 = vmatpush1.msra.mxu0 0.0
    %1329 = vmatprep.mubr.f32.mxu0 0.0
    %1330 = vmatmul.mubr.f32.gmra.mrb[0].mxu0 %v1263
    %v1331 = vpop.f32.mrb[0].mxu0
    %v1332 = vadd.f32 0.0, %v1331
    %v1333 = vpop.f32.mrb[0].mxu0
    %1334 = vdwg.mxu0
    %v1335 = vmul.f32 %v1187, %v1332
    %v1337 = vunpack.c.l.s4 1966171168
    %v1338 = vunpack.c.0.s8 %v1337
    %v1339 = vlaneseq
    %v1340 = vshrl.u32 %v1339, 7
    %v1341 = vsub.s32 %v1338, %v1340
    %v1342 = vrot.slane %v211, %v1341
    %v1344 = vunpack.c.l.s4 1966171168
    %v1345 = vunpack.c.0.s8 %v1344
    %v1346 = vlaneseq
    %v1347 = vshrl.u32 %v1346, 7
    %v1348 = vsub.s32 %v1345, %v1347
    %v1349 = vrot.slane %v1342, %v1348
    %v1350 = vcombine.high %v1349, %v1349
    %v1352 = vmul.f32 %v1335, %v1350
    %v1354 = vunpack.c.l.s4 1966171168
    %v1355 = vunpack.c.0.s8 %v1354
    %v1356 = vlaneseq
    %v1357 = vshrl.u32 %v1356, 7
    %v1358 = vsub.s32 %v1355, %v1357
    %v1359 = vrot.slane %v212, %v1358
    %v1361 = vunpack.c.l.s4 1966171168
    %v1362 = vunpack.c.0.s8 %v1361
    %v1363 = vlaneseq
    %v1364 = vshrl.u32 %v1363, 7
    %v1365 = vsub.s32 %v1362, %v1364
    %v1366 = vrot.slane %v1359, %v1365
    %v1367 = vcombine.high %v1366, %v1366
    %v1369 = vadd.f32 %v1352, %v1367
    %v1370 = vld [vmem:[%s4] sm:$0xff]
    %v1371 = vld [vmem:[%s4 + $0x8] sm:$0xff]
    %v1372 = vld [vmem:[%s4 + $0x10] sm:$0xff]
    %v1373 = vld [vmem:[%s4 + $0x18] sm:$0xff]
    %v1374 = vld [vmem:[%s4 + $0x20] sm:$0xff]
    %v1375 = vld [vmem:[%s4 + $0x28] sm:$0xff]
    %v1376 = vld [vmem:[%s4 + $0x30] sm:$0xff]
    %v1377 = vld [vmem:[%s4 + $0x38] sm:$0xff]
    %v1378 = vld [vmem:[%s4 + $0x40] sm:$0xff]
    %v1379 = vld [vmem:[%s4 + $0x48] sm:$0xff]
    %v1380 = vld [vmem:[%s4 + $0x50] sm:$0xff]
    %v1381 = vld [vmem:[%s4 + $0x58] sm:$0xff]
    %v1382 = vld [vmem:[%s4 + $0x60] sm:$0xff]
    %v1383 = vld [vmem:[%s4 + $0x68] sm:$0xff]
    %v1384 = vld [vmem:[%s4 + $0x70] sm:$0xff]
    %v1385 = vld [vmem:[%s4 + $0x78] sm:$0xff]
    %v1386 = vld [vmem:[%s4 + $0x80] sm:$0xff]
    %v1387 = vld [vmem:[%s4 + $0x88] sm:$0xff]
    %v1388 = vld [vmem:[%s4 + $0x90] sm:$0xff]
    %v1389 = vld [vmem:[%s4 + $0x98] sm:$0xff]
    %v1390 = vld [vmem:[%s4 + $0xa0] sm:$0xff]
    %v1391 = vld [vmem:[%s4 + $0xa8] sm:$0xff]
    %v1392 = vld [vmem:[%s4 + $0xb0] sm:$0xff]
    %v1393 = vld [vmem:[%s4 + $0xb8] sm:$0xff]
    %v1394 = vld [vmem:[%s4 + $0xc0] sm:$0xff]
    %v1395 = vld [vmem:[%s4 + $0xc8] sm:$0xff]
    %v1396 = vld [vmem:[%s4 + $0xd0] sm:$0xff]
    %v1397 = vld [vmem:[%s4 + $0xd8] sm:$0xff]
    %v1398 = vld [vmem:[%s4 + $0xe0] sm:$0xff]
    %v1399 = vld [vmem:[%s4 + $0xe8] sm:$0xff]
    %v1400 = vld [vmem:[%s4 + $0xf0] sm:$0xff]
    %v1401 = vld [vmem:[%s4 + $0xf8] sm:$0xff]
    %v1402 = vrot.slane %v211, 4
    %v1403 = vrot.slane %v212, 4
    %1406 = vmatprep.subr.mxu0 %v1371
    %1407 = vmatpush1.msra.mxu0 %v1370
    %1408 = vmatprep.subr.mxu0 %v1373
    %1409 = vmatpush1.msra.mxu0 %v1372
    %1410 = vmatprep.subr.mxu0 %v1375
    %1411 = vmatpush1.msra.mxu0 %v1374
    %1412 = vmatprep.subr.mxu0 %v1377
    %1413 = vmatpush1.msra.mxu0 %v1376
    %1414 = vmatprep.subr.mxu0 %v1379
    %1415 = vmatpush1.msra.mxu0 %v1378
    %1416 = vmatprep.subr.mxu0 %v1381
    %1417 = vmatpush1.msra.mxu0 %v1380
    %1418 = vmatprep.subr.mxu0 %v1383
    %1419 = vmatpush1.msra.mxu0 %v1382
    %1420 = vmatprep.subr.mxu0 %v1385
    %1421 = vmatpush1.msra.mxu0 %v1384
    %1422 = vmatprep.subr.mxu0 %v1387
    %1423 = vmatpush1.msra.mxu0 %v1386
    %1424 = vmatprep.subr.mxu0 %v1389
    %1425 = vmatpush1.msra.mxu0 %v1388
    %1426 = vmatprep.subr.mxu0 %v1391
    %1427 = vmatpush1.msra.mxu0 %v1390
    %1428 = vmatprep.subr.mxu0 %v1393
    %1429 = vmatpush1.msra.mxu0 %v1392
    %1430 = vmatprep.subr.mxu0 %v1395
    %1431 = vmatpush1.msra.mxu0 %v1394
    %1432 = vmatprep.subr.mxu0 %v1397
    %1433 = vmatpush1.msra.mxu0 %v1396
    %1434 = vmatprep.subr.mxu0 %v1399
    %1435 = vmatpush1.msra.mxu0 %v1398
    %1436 = vmatprep.subr.mxu0 %v1401
    %1437 = vmatpush1.msra.mxu0 %v1400
    %1438 = vmatprep.subr.mxu0 0.0
    %1439 = vmatpush1.msra.mxu0 0.0
    %1440 = vmatprep.subr.mxu0 0.0
    %1441 = vmatpush1.msra.mxu0 0.0
    %1442 = vmatprep.subr.mxu0 0.0
    %1443 = vmatpush1.msra.mxu0 0.0
    %1444 = vmatprep.subr.mxu0 0.0
    %1445 = vmatpush1.msra.mxu0 0.0
    %1446 = vmatprep.subr.mxu0 0.0
    %1447 = vmatpush1.msra.mxu0 0.0
    %1448 = vmatprep.subr.mxu0 0.0
    %1449 = vmatpush1.msra.mxu0 0.0
    %1450 = vmatprep.subr.mxu0 0.0
    %1451 = vmatpush1.msra.mxu0 0.0
    %1452 = vmatprep.subr.mxu0 0.0
    %1453 = vmatpush1.msra.mxu0 0.0
    %1454 = vmatprep.subr.mxu0 0.0
    %1455 = vmatpush1.msra.mxu0 0.0
    %1456 = vmatprep.subr.mxu0 0.0
    %1457 = vmatpush1.msra.mxu0 0.0
    %1458 = vmatprep.subr.mxu0 0.0
    %1459 = vmatpush1.msra.mxu0 0.0
    %1460 = vmatprep.subr.mxu0 0.0
    %1461 = vmatpush1.msra.mxu0 0.0
    %1462 = vmatprep.subr.mxu0 0.0
    %1463 = vmatpush1.msra.mxu0 0.0
    %1464 = vmatprep.subr.mxu0 0.0
    %1465 = vmatpush1.msra.mxu0 0.0
    %1466 = vmatprep.subr.mxu0 0.0
    %1467 = vmatpush1.msra.mxu0 0.0
    %1468 = vmatprep.subr.mxu0 0.0
    %1469 = vmatpush1.msra.mxu0 0.0
    %1470 = vmatprep.mubr.f32.mxu0 0.0
    %1471 = vmatmul.mubr.f32.gmra.mrb[0].mxu0 %v1369
    %v1472 = vpop.f32.mrb[0].mxu0
    %v1473 = vadd.f32 %v1402, %v1472
    %v1474 = vpop.f32.mrb[0].mxu0
    %v1475 = vadd.f32 %v1403, %v1474
    %1476 = vdwg.mxu0
    %v1477 = vmul.f32 %v1473, 0.5
    %v1478 = vmul.f32 %v1475, 0.5
    %v1479 = vmul.f32 %v1473, 0.044715
    %v1480 = vmul.f32 %v1475, 0.044715
    %v1481 = vmul.f32 %v1479, %v1473
    %v1482 = vmul.f32 %v1480, %v1475
    %v1483 = vmul.f32 %v1481, %v1473
    %v1484 = vmul.f32 %v1482, %v1475
    %v1485 = vadd.f32 %v1473, %v1483
    %v1486 = vadd.f32 %v1475, %v1484
    %v1487 = vmul.f32 %v1485, 0.7978846
    %v1488 = vmul.f32 %v1486, 0.7978846
    %v1489 = vtanh.pop %v1487
    %v1490 = vtanh.pop %v1488
    %v1491 = vadd.f32 %v1489, 1.0
    %v1492 = vadd.f32 %v1490, 1.0
    %v1493 = vmul.f32 %v1477, %v1491
    %v1494 = vmul.f32 %v1478, %v1492
    %v1495 = vld [vmem:[#allocation7] sm:$0xff]
    %v1496 = vld [vmem:[#allocation7 + $0x8] sm:$0xff]
    %v1497 = vld [vmem:[#allocation7 + $0x10] sm:$0xff]
    %v1498 = vld [vmem:[#allocation7 + $0x18] sm:$0xff]
    %v1499 = vld [vmem:[#allocation7 + $0x20] sm:$0xff]
    %v1500 = vld [vmem:[#allocation7 + $0x28] sm:$0xff]
    %v1501 = vld [vmem:[#allocation7 + $0x30] sm:$0xff]
    %v1502 = vld [vmem:[#allocation7 + $0x38] sm:$0xff]
    %v1503 = vld [vmem:[#allocation7 + $0x40] sm:$0xff]
    %v1504 = vld [vmem:[#allocation7 + $0x48] sm:$0xff]
    %v1505 = vld [vmem:[#allocation7 + $0x50] sm:$0xff]
    %v1506 = vld [vmem:[#allocation7 + $0x58] sm:$0xff]
    %v1507 = vld [vmem:[#allocation7 + $0x60] sm:$0xff]
    %v1508 = vld [vmem:[#allocation7 + $0x68] sm:$0xff]
    %v1509 = vld [vmem:[#allocation7 + $0x70] sm:$0xff]
    %v1510 = vld [vmem:[#allocation7 + $0x78] sm:$0xff]
    %v1511 = vld [vmem:[#allocation7 + $0x80] sm:$0xff]
    %v1512 = vld [vmem:[#allocation7 + $0x88] sm:$0xff]
    %v1513 = vld [vmem:[#allocation7 + $0x90] sm:$0xff]
    %v1514 = vld [vmem:[#allocation7 + $0x98] sm:$0xff]
    %v1515 = vld [vmem:[#allocation7 + $0xa0] sm:$0xff]
    %v1516 = vld [vmem:[#allocation7 + $0xa8] sm:$0xff]
    %v1517 = vld [vmem:[#allocation7 + $0xb0] sm:$0xff]
    %v1518 = vld [vmem:[#allocation7 + $0xb8] sm:$0xff]
    %v1519 = vld [vmem:[#allocation7 + $0xc0] sm:$0xff]
    %v1520 = vld [vmem:[#allocation7 + $0xc8] sm:$0xff]
    %v1521 = vld [vmem:[#allocation7 + $0xd0] sm:$0xff]
    %v1522 = vld [vmem:[#allocation7 + $0xd8] sm:$0xff]
    %v1523 = vld [vmem:[#allocation7 + $0xe0] sm:$0xff]
    %v1524 = vld [vmem:[#allocation7 + $0xe8] sm:$0xff]
    %v1525 = vld [vmem:[#allocation7 + $0xf0] sm:$0xff]
    %v1526 = vld [vmem:[#allocation7 + $0xf8] sm:$0xff]
    %v1527 = vrot.slane %v211, 5
    %1529 = vmatprep.subr.mxu0 0.0
    %1530 = vmatpush1.msra.mxu0 %v1495
    %1531 = vmatprep.subr.mxu0 0.0
    %1532 = vmatpush1.msra.mxu0 %v1496
    %1533 = vmatprep.subr.mxu0 0.0
    %1534 = vmatpush1.msra.mxu0 %v1497
    %1535 = vmatprep.subr.mxu0 0.0
    %1536 = vmatpush1.msra.mxu0 %v1498
    %1537 = vmatprep.subr.mxu0 0.0
    %1538 = vmatpush1.msra.mxu0 %v1499
    %1539 = vmatprep.subr.mxu0 0.0
    %1540 = vmatpush1.msra.mxu0 %v1500
    %1541 = vmatprep.subr.mxu0 0.0
    %1542 = vmatpush1.msra.mxu0 %v1501
    %1543 = vmatprep.subr.mxu0 0.0
    %1544 = vmatpush1.msra.mxu0 %v1502
    %1545 = vmatprep.subr.mxu0 0.0
    %1546 = vmatpush1.msra.mxu0 %v1503
    %1547 = vmatprep.subr.mxu0 0.0
    %1548 = vmatpush1.msra.mxu0 %v1504
    %1549 = vmatprep.subr.mxu0 0.0
    %1550 = vmatpush1.msra.mxu0 %v1505
    %1551 = vmatprep.subr.mxu0 0.0
    %1552 = vmatpush1.msra.mxu0 %v1506
    %1553 = vmatprep.subr.mxu0 0.0
    %1554 = vmatpush1.msra.mxu0 %v1507
    %1555 = vmatprep.subr.mxu0 0.0
    %1556 = vmatpush1.msra.mxu0 %v1508
    %1557 = vmatprep.subr.mxu0 0.0
    %1558 = vmatpush1.msra.mxu0 %v1509
    %1559 = vmatprep.subr.mxu0 0.0
    %1560 = vmatpush1.msra.mxu0 %v1510
    %1561 = vmatprep.subr.mxu0 0.0
    %1562 = vmatpush1.msra.mxu0 %v1511
    %1563 = vmatprep.subr.mxu0 0.0
    %1564 = vmatpush1.msra.mxu0 %v1512
    %1565 = vmatprep.subr.mxu0 0.0
    %1566 = vmatpush1.msra.mxu0 %v1513
    %1567 = vmatprep.subr.mxu0 0.0
    %1568 = vmatpush1.msra.mxu0 %v1514
    %1569 = vmatprep.subr.mxu0 0.0
    %1570 = vmatpush1.msra.mxu0 %v1515
    %1571 = vmatprep.subr.mxu0 0.0
    %1572 = vmatpush1.msra.mxu0 %v1516
    %1573 = vmatprep.subr.mxu0 0.0
    %1574 = vmatpush1.msra.mxu0 %v1517
    %1575 = vmatprep.subr.mxu0 0.0
    %1576 = vmatpush1.msra.mxu0 %v1518
    %1577 = vmatprep.subr.mxu0 0.0
    %1578 = vmatpush1.msra.mxu0 %v1519
    %1579 = vmatprep.subr.mxu0 0.0
    %1580 = vmatpush1.msra.mxu0 %v1520
    %1581 = vmatprep.subr.mxu0 0.0
    %1582 = vmatpush1.msra.mxu0 %v1521
    %1583 = vmatprep.subr.mxu0 0.0
    %1584 = vmatpush1.msra.mxu0 %v1522
    %1585 = vmatprep.subr.mxu0 0.0
    %1586 = vmatpush1.msra.mxu0 %v1523
    %1587 = vmatprep.subr.mxu0 0.0
    %1588 = vmatpush1.msra.mxu0 %v1524
    %1589 = vmatprep.subr.mxu0 0.0
    %1590 = vmatpush1.msra.mxu0 %v1525
    %1591 = vmatprep.subr.mxu0 0.0
    %1592 = vmatpush1.msra.mxu0 %v1526
    %1593 = vmatprep.mubr.f32.mxu0 %v1494
    %1594 = vmatmul.mubr.f32.gmra.mrb[0].mxu0 %v1493
    %v1595 = vpop.f32.mrb[0].mxu0
    %v1596 = vadd.f32 %v1527, %v1595
    %v1597 = vpop.f32.mrb[0].mxu0
    %1598 = vdwg.mxu0
    %v1599 = vadd.f32 %v1369, %v1596
    %1600 = vmatprep.subr.mxu0 0.0
    %1601 = vmatpush1.msra.mxu0 %v176
    %1602 = vmatprep.subr.mxu0 0.0
    %1603 = vmatpush1.msra.mxu0 %v177
    %1604 = vmatprep.subr.mxu0 0.0
    %1605 = vmatpush1.msra.mxu0 %v178
    %1606 = vmatprep.subr.mxu0 0.0
    %1607 = vmatpush1.msra.mxu0 %v179
    %1608 = vmatprep.subr.mxu0 0.0
    %1609 = vmatpush1.msra.mxu0 %v180
    %1610 = vmatprep.subr.mxu0 0.0
    %1611 = vmatpush1.msra.mxu0 %v181
    %1612 = vmatprep.subr.mxu0 0.0
    %1613 = vmatpush1.msra.mxu0 %v182
    %1614 = vmatprep.subr.mxu0 0.0
    %1615 = vmatpush1.msra.mxu0 %v183
    %1616 = vmatprep.subr.mxu0 0.0
    %1617 = vmatpush1.msra.mxu0 %v184
    %1618 = vmatprep.subr.mxu0 0.0
    %1619 = vmatpush1.msra.mxu0 %v185
    %1620 = vmatprep.subr.mxu0 0.0
    %1621 = vmatpush1.msra.mxu0 %v186
    %1622 = vmatprep.subr.mxu0 0.0
    %1623 = vmatpush1.msra.mxu0 %v187
    %1624 = vmatprep.subr.mxu0 0.0
    %1625 = vmatpush1.msra.mxu0 %v188
    %1626 = vmatprep.subr.mxu0 0.0
    %1627 = vmatpush1.msra.mxu0 %v189
    %1628 = vmatprep.subr.mxu0 0.0
    %1629 = vmatpush1.msra.mxu0 %v190
    %1630 = vmatprep.subr.mxu0 0.0
    %1631 = vmatpush1.msra.mxu0 %v191
    %1632 = vmatprep.subr.mxu0 0.0
    %1633 = vmatpush1.msra.mxu0 0.0
    %1634 = vmatprep.subr.mxu0 0.0
    %1635 = vmatpush1.msra.mxu0 0.0
    %1636 = vmatprep.subr.mxu0 0.0
    %1637 = vmatpush1.msra.mxu0 0.0
    %1638 = vmatprep.subr.mxu0 0.0
    %1639 = vmatpush1.msra.mxu0 0.0
    %1640 = vmatprep.subr.mxu0 0.0
    %1641 = vmatpush1.msra.mxu0 0.0
    %1642 = vmatprep.subr.mxu0 0.0
    %1643 = vmatpush1.msra.mxu0 0.0
    %1644 = vmatprep.subr.mxu0 0.0
    %1645 = vmatpush1.msra.mxu0 0.0
    %1646 = vmatprep.subr.mxu0 0.0
    %1647 = vmatpush1.msra.mxu0 0.0
    %1648 = vmatprep.subr.mxu0 0.0
    %1649 = vmatpush1.msra.mxu0 0.0
    %1650 = vmatprep.subr.mxu0 0.0
    %1651 = vmatpush1.msra.mxu0 0.0
    %1652 = vmatprep.subr.mxu0 0.0
    %1653 = vmatpush1.msra.mxu0 0.0
    %1654 = vmatprep.subr.mxu0 0.0
    %1655 = vmatpush1.msra.mxu0 0.0
    %1656 = vmatprep.subr.mxu0 0.0
    %1657 = vmatpush1.msra.mxu0 0.0
    %1658 = vmatprep.subr.mxu0 0.0
    %1659 = vmatpush1.msra.mxu0 0.0
    %1660 = vmatprep.subr.mxu0 0.0
    %1661 = vmatpush1.msra.mxu0 0.0
    %1662 = vmatprep.subr.mxu0 0.0
    %1663 = vmatpush1.msra.mxu0 0.0
    %1664 = vmatprep.mubr.f32.mxu0 0.0
    %1665 = vmatmul.mubr.f32.gmra.mrb[0].mxu0 %v1599
    %v1666 = vpop.f32.mrb[0].mxu0
    %v1667 = vadd.f32 0.0, %v1666
    %v1668 = vpop.f32.mrb[0].mxu0
    %1669 = vdwg.mxu0
    %v1670 = vmul.f32 %v1667, 0.03125
    %v1672 = vsel %vm1109, %v1670, 0
    %1674 = vmatprep.subr.mxu0 0.0
    %1675 = vmatpush1.msra.mxu0 %v1115
    %1676 = vmatprep.subr.mxu0 0.0
    %1677 = vmatpush1.msra.mxu0 0.0
    %1678 = vmatprep.subr.mxu0 0.0
    %1679 = vmatpush1.msra.mxu0 0.0
    %1680 = vmatprep.subr.mxu0 0.0
    %1681 = vmatpush1.msra.mxu0 0.0
    %1682 = vmatprep.subr.mxu0 0.0
    %1683 = vmatpush1.msra.mxu0 0.0
    %1684 = vmatprep.subr.mxu0 0.0
    %1685 = vmatpush1.msra.mxu0 0.0
    %1686 = vmatprep.subr.mxu0 0.0
    %1687 = vmatpush1.msra.mxu0 0.0
    %1688 = vmatprep.subr.mxu0 0.0
    %1689 = vmatpush1.msra.mxu0 0.0
    %1690 = vmatprep.subr.mxu0 0.0
    %1691 = vmatpush1.msra.mxu0 0.0
    %1692 = vmatprep.subr.mxu0 0.0
    %1693 = vmatpush1.msra.mxu0 0.0
    %1694 = vmatprep.subr.mxu0 0.0
    %1695 = vmatpush1.msra.mxu0 0.0
    %1696 = vmatprep.subr.mxu0 0.0
    %1697 = vmatpush1.msra.mxu0 0.0
    %1698 = vmatprep.subr.mxu0 0.0
    %1699 = vmatpush1.msra.mxu0 0.0
    %1700 = vmatprep.subr.mxu0 0.0
    %1701 = vmatpush1.msra.mxu0 0.0
    %1702 = vmatprep.subr.mxu0 0.0
    %1703 = vmatpush1.msra.mxu0 0.0
    %1704 = vmatprep.subr.mxu0 0.0
    %1705 = vmatpush1.msra.mxu0 0.0
    %1706 = vmatprep.subr.mxu0 0.0
    %1707 = vmatpush1.msra.mxu0 0.0
    %1708 = vmatprep.subr.mxu0 0.0
    %1709 = vmatpush1.msra.mxu0 0.0
    %1710 = vmatprep.subr.mxu0 0.0
    %1711 = vmatpush1.msra.mxu0 0.0
    %1712 = vmatprep.subr.mxu0 0.0
    %1713 = vmatpush1.msra.mxu0 0.0
    %1714 = vmatprep.subr.mxu0 0.0
    %1715 = vmatpush1.msra.mxu0 0.0
    %1716 = vmatprep.subr.mxu0 0.0
    %1717 = vmatpush1.msra.mxu0 0.0
    %1718 = vmatprep.subr.mxu0 0.0
    %1719 = vmatpush1.msra.mxu0 0.0
    %1720 = vmatprep.subr.mxu0 0.0
    %1721 = vmatpush1.msra.mxu0 0.0
    %1722 = vmatprep.subr.mxu0 0.0
    %1723 = vmatpush1.msra.mxu0 0.0
    %1724 = vmatprep.subr.mxu0 0.0
    %1725 = vmatpush1.msra.mxu0 0.0
    %1726 = vmatprep.subr.mxu0 0.0
    %1727 = vmatpush1.msra.mxu0 0.0
    %1728 = vmatprep.subr.mxu0 0.0
    %1729 = vmatpush1.msra.mxu0 0.0
    %1730 = vmatprep.subr.mxu0 0.0
    %1731 = vmatpush1.msra.mxu0 0.0
    %1732 = vmatprep.subr.mxu0 0.0
    %1733 = vmatpush1.msra.mxu0 0.0
    %1734 = vmatprep.subr.mxu0 0.0
    %1735 = vmatpush1.msra.mxu0 0.0
    %1736 = vmatprep.subr.mxu0 0.0
    %1737 = vmatpush1.msra.mxu0 0.0
    %1738 = vmatprep.mubr.f32.mxu0 0.0
    %1739 = vmatmul.mubr.f32.gmra.mrb[0].mxu0 %v1672
    %v1740 = vpop.f32.mrb[0].mxu0
    %v1741 = vadd.f32 0.0, %v1740
    %v1742 = vpop.f32.mrb[0].mxu0
    %1743 = vdwg.mxu0
    %v1744 = vsub.f32 %v1599, %v1741
    %v1745 = vmul.f32 %v1744, %v1744
    %1746 = vmatprep.subr.mxu0 0.0
    %1747 = vmatpush1.msra.mxu0 %v176
    %1748 = vmatprep.subr.mxu0 0.0
    %1749 = vmatpush1.msra.mxu0 %v177
    %1750 = vmatprep.subr.mxu0 0.0
    %1751 = vmatpush1.msra.mxu0 %v178
    %1752 = vmatprep.subr.mxu0 0.0
    %1753 = vmatpush1.msra.mxu0 %v179
    %1754 = vmatprep.subr.mxu0 0.0
    %1755 = vmatpush1.msra.mxu0 %v180
    %1756 = vmatprep.subr.mxu0 0.0
    %1757 = vmatpush1.msra.mxu0 %v181
    %1758 = vmatprep.subr.mxu0 0.0
    %1759 = vmatpush1.msra.mxu0 %v182
    %1760 = vmatprep.subr.mxu0 0.0
    %1761 = vmatpush1.msra.mxu0 %v183
    %1762 = vmatprep.subr.mxu0 0.0
    %1763 = vmatpush1.msra.mxu0 %v184
    %1764 = vmatprep.subr.mxu0 0.0
    %1765 = vmatpush1.msra.mxu0 %v185
    %1766 = vmatprep.subr.mxu0 0.0
    %1767 = vmatpush1.msra.mxu0 %v186
    %1768 = vmatprep.subr.mxu0 0.0
    %1769 = vmatpush1.msra.mxu0 %v187
    %1770 = vmatprep.subr.mxu0 0.0
    %1771 = vmatpush1.msra.mxu0 %v188
    %1772 = vmatprep.subr.mxu0 0.0
    %1773 = vmatpush1.msra.mxu0 %v189
    %1774 = vmatprep.subr.mxu0 0.0
    %1775 = vmatpush1.msra.mxu0 %v190
    %1776 = vmatprep.subr.mxu0 0.0
    %1777 = vmatpush1.msra.mxu0 %v191
    %1778 = vmatprep.subr.mxu0 0.0
    %1779 = vmatpush1.msra.mxu0 0.0
    %1780 = vmatprep.subr.mxu0 0.0
    %1781 = vmatpush1.msra.mxu0 0.0
    %1782 = vmatprep.subr.mxu0 0.0
    %1783 = vmatpush1.msra.mxu0 0.0
    %1784 = vmatprep.subr.mxu0 0.0
    %1785 = vmatpush1.msra.mxu0 0.0
    %1786 = vmatprep.subr.mxu0 0.0
    %1787 = vmatpush1.msra.mxu0 0.0
    %1788 = vmatprep.subr.mxu0 0.0
    %1789 = vmatpush1.msra.mxu0 0.0
    %1790 = vmatprep.subr.mxu0 0.0
    %1791 = vmatpush1.msra.mxu0 0.0
    %1792 = vmatprep.subr.mxu0 0.0
    %1793 = vmatpush1.msra.mxu0 0.0
    %1794 = vmatprep.subr.mxu0 0.0
    %1795 = vmatpush1.msra.mxu0 0.0
    %1796 = vmatprep.subr.mxu0 0.0
    %1797 = vmatpush1.msra.mxu0 0.0
    %1798 = vmatprep.subr.mxu0 0.0
    %1799 = vmatpush1.msra.mxu0 0.0
    %1800 = vmatprep.subr.mxu0 0.0
    %1801 = vmatpush1.msra.mxu0 0.0
    %1802 = vmatprep.subr.mxu0 0.0
    %1803 = vmatpush1.msra.mxu0 0.0
    %1804 = vmatprep.subr.mxu0 0.0
    %1805 = vmatpush1.msra.mxu0 0.0
    %1806 = vmatprep.subr.mxu0 0.0
    %1807 = vmatpush1.msra.mxu0 0.0
    %1808 = vmatprep.subr.mxu0 0.0
    %1809 = vmatpush1.msra.mxu0 0.0
    %1810 = vmatprep.mubr.f32.mxu0 0.0
    %1811 = vmatmul.mubr.f32.gmra.mrb[0].mxu0 %v1745
    %v1812 = vpop.f32.mrb[0].mxu0
    %v1813 = vadd.f32 0.0, %v1812
    %v1814 = vpop.f32.mrb[0].mxu0
    %1815 = vdwg.mxu0
    %v1816 = vmul.f32 %v1813, 0.03125
    %v1817 = vadd.f32 %v1816, 1e-05
    %v1818 = vrsqrt.pop %v1817
    %v1820 = vsel %vm1109, %v1818, 0
    %1822 = vmatprep.subr.mxu0 0.0
    %1823 = vmatpush1.msra.mxu0 %v1115
    %1824 = vmatprep.subr.mxu0 0.0
    %1825 = vmatpush1.msra.mxu0 0.0
    %1826 = vmatprep.subr.mxu0 0.0
    %1827 = vmatpush1.msra.mxu0 0.0
    %1828 = vmatprep.subr.mxu0 0.0
    %1829 = vmatpush1.msra.mxu0 0.0
    %1830 = vmatprep.subr.mxu0 0.0
    %1831 = vmatpush1.msra.mxu0 0.0
    %1832 = vmatprep.subr.mxu0 0.0
    %1833 = vmatpush1.msra.mxu0 0.0
    %1834 = vmatprep.subr.mxu0 0.0
    %1835 = vmatpush1.msra.mxu0 0.0
    %1836 = vmatprep.subr.mxu0 0.0
    %1837 = vmatpush1.msra.mxu0 0.0
    %1838 = vmatprep.subr.mxu0 0.0
    %1839 = vmatpush1.msra.mxu0 0.0
    %1840 = vmatprep.subr.mxu0 0.0
    %1841 = vmatpush1.msra.mxu0 0.0
    %1842 = vmatprep.subr.mxu0 0.0
    %1843 = vmatpush1.msra.mxu0 0.0
    %1844 = vmatprep.subr.mxu0 0.0
    %1845 = vmatpush1.msra.mxu0 0.0
    %1846 = vmatprep.subr.mxu0 0.0
    %1847 = vmatpush1.msra.mxu0 0.0
    %1848 = vmatprep.subr.mxu0 0.0
    %1849 = vmatpush1.msra.mxu0 0.0
    %1850 = vmatprep.subr.mxu0 0.0
    %1851 = vmatpush1.msra.mxu0 0.0
    %1852 = vmatprep.subr.mxu0 0.0
    %1853 = vmatpush1.msra.mxu0 0.0
    %1854 = vmatprep.subr.mxu0 0.0
    %1855 = vmatpush1.msra.mxu0 0.0
    %1856 = vmatprep.subr.mxu0 0.0
    %1857 = vmatpush1.msra.mxu0 0.0
    %1858 = vmatprep.subr.mxu0 0.0
    %1859 = vmatpush1.msra.mxu0 0.0
    %1860 = vmatprep.subr.mxu0 0.0
    %1861 = vmatpush1.msra.mxu0 0.0
    %1862 = vmatprep.subr.mxu0 0.0
    %1863 = vmatpush1.msra.mxu0 0.0
    %1864 = vmatprep.subr.mxu0 0.0
    %1865 = vmatpush1.msra.mxu0 0.0
    %1866 = vmatprep.subr.mxu0 0.0
    %1867 = vmatpush1.msra.mxu0 0.0
    %1868 = vmatprep.subr.mxu0 0.0
    %1869 = vmatpush1.msra.mxu0 0.0
    %1870 = vmatprep.subr.mxu0 0.0
    %1871 = vmatpush1.msra.mxu0 0.0
    %1872 = vmatprep.subr.mxu0 0.0
    %1873 = vmatpush1.msra.mxu0 0.0
    %1874 = vmatprep.subr.mxu0 0.0
    %1875 = vmatpush1.msra.mxu0 0.0
    %1876 = vmatprep.subr.mxu0 0.0
    %1877 = vmatpush1.msra.mxu0 0.0
    %1878 = vmatprep.subr.mxu0 0.0
    %1879 = vmatpush1.msra.mxu0 0.0
    %1880 = vmatprep.subr.mxu0 0.0
    %1881 = vmatpush1.msra.mxu0 0.0
    %1882 = vmatprep.subr.mxu0 0.0
    %1883 = vmatpush1.msra.mxu0 0.0
    %1884 = vmatprep.subr.mxu0 0.0
    %1885 = vmatpush1.msra.mxu0 0.0
    %1886 = vmatprep.mubr.f32.mxu0 0.0
    %1887 = vmatmul.mubr.f32.gmra.mrb[0].mxu0 %v1820
    %v1888 = vpop.f32.mrb[0].mxu0
    %v1889 = vadd.f32 0.0, %v1888
    %v1890 = vpop.f32.mrb[0].mxu0
    %1891 = vdwg.mxu0
    %v1892 = vmul.f32 %v1744, %v1889
    %v1893 = vcombine.high %v1342, %v1342
    %v1895 = vunpack.c.l.s4 1966171168
    %v1896 = vunpack.c.0.s8 %v1895
    %v1897 = vlaneseq
    %v1898 = vshrl.u32 %v1897, 7
    %v1899 = vsub.s32 %v1896, %v1898
    %v1900 = vrot.slane %v1893, %v1899
    %v1901 = vcombine.high %v1900, %v1900
    %v1903 = vmul.f32 %v1892, %v1901
    %v1904 = vcombine.high %v1359, %v1359
    %v1906 = vunpack.c.l.s4 1966171168
    %v1907 = vunpack.c.0.s8 %v1906
    %v1908 = vlaneseq
    %v1909 = vshrl.u32 %v1908, 7
    %v1910 = vsub.s32 %v1907, %v1909
    %v1911 = vrot.slane %v1904, %v1910
    %v1912 = vcombine.high %v1911, %v1911
    %v1914 = vadd.f32 %v1903, %v1912
    %v1915 = vld [vmem:[#allocation8] sm:$0xff]
    %v1916 = vld [vmem:[#allocation8 + $0x8] sm:$0xff]
    %v1917 = vld [vmem:[#allocation8 + $0x10] sm:$0xff]
    %v1918 = vld [vmem:[#allocation8 + $0x18] sm:$0xff]
    %v1919 = vld [vmem:[#allocation8 + $0x20] sm:$0xff]
    %v1920 = vld [vmem:[#allocation8 + $0x28] sm:$0xff]
    %v1921 = vld [vmem:[#allocation8 + $0x30] sm:$0xff]
    %v1922 = vld [vmem:[#allocation8 + $0x38] sm:$0xff]
    %v1923 = vld [vmem:[#allocation8 + $0x40] sm:$0xff]
    %v1924 = vld [vmem:[#allocation8 + $0x48] sm:$0xff]
    %v1925 = vld [vmem:[#allocation8 + $0x50] sm:$0xff]
    %v1926 = vld [vmem:[#allocation8 + $0x58] sm:$0xff]
    %v1927 = vld [vmem:[#allocation8 + $0x60] sm:$0xff]
    %v1928 = vld [vmem:[#allocation8 + $0x68] sm:$0xff]
    %v1929 = vld [vmem:[#allocation8 + $0x70] sm:$0xff]
    %v1930 = vld [vmem:[#allocation8 + $0x78] sm:$0xff]
    %v1931 = vld [vmem:[#allocation8 + $0x80] sm:$0xff]
    %v1932 = vld [vmem:[#allocation8 + $0x88] sm:$0xff]
    %v1933 = vld [vmem:[#allocation8 + $0x90] sm:$0xff]
    %v1934 = vld [vmem:[#allocation8 + $0x98] sm:$0xff]
    %v1935 = vld [vmem:[#allocation8 + $0xa0] sm:$0xff]
    %v1936 = vld [vmem:[#allocation8 + $0xa8] sm:$0xff]
    %v1937 = vld [vmem:[#allocation8 + $0xb0] sm:$0xff]
    %v1938 = vld [vmem:[#allocation8 + $0xb8] sm:$0xff]
    %v1939 = vld [vmem:[#allocation8 + $0xc0] sm:$0xff]
    %v1940 = vld [vmem:[#allocation8 + $0xc8] sm:$0xff]
    %v1941 = vld [vmem:[#allocation8 + $0xd0] sm:$0xff]
    %v1942 = vld [vmem:[#allocation8 + $0xd8] sm:$0xff]
    %v1943 = vld [vmem:[#allocation8 + $0xe0] sm:$0xff]
    %v1944 = vld [vmem:[#allocation8 + $0xe8] sm:$0xff]
    %v1945 = vld [vmem:[#allocation8 + $0xf0] sm:$0xff]
    %v1946 = vld [vmem:[#allocation8 + $0xf8] sm:$0xff]
    %v1947 = vld [vmem:[#allocation8 + $0x100] sm:$0xff]
    %v1948 = vld [vmem:[#allocation8 + $0x108] sm:$0xff]
    %v1949 = vld [vmem:[#allocation8 + $0x110] sm:$0xff]
    %v1950 = vld [vmem:[#allocation8 + $0x118] sm:$0xff]
    %v1951 = vld [vmem:[#allocation8 + $0x120] sm:$0xff]
    %v1952 = vld [vmem:[#allocation8 + $0x128] sm:$0xff]
    %v1953 = vld [vmem:[#allocation8 + $0x130] sm:$0xff]
    %v1954 = vld [vmem:[#allocation8 + $0x138] sm:$0xff]
    %v1955 = vld [vmem:[#allocation8 + $0x140] sm:$0xff]
    %v1956 = vld [vmem:[#allocation8 + $0x148] sm:$0xff]
    %v1957 = vld [vmem:[#allocation8 + $0x150] sm:$0xff]
    %v1958 = vld [vmem:[#allocation8 + $0x158] sm:$0xff]
    %v1959 = vld [vmem:[#allocation8 + $0x160] sm:$0xff]
    %v1960 = vld [vmem:[#allocation8 + $0x168] sm:$0xff]
    %v1961 = vld [vmem:[#allocation8 + $0x170] sm:$0xff]
    %v1962 = vld [vmem:[#allocation8 + $0x178] sm:$0xff]
    %1963 = vmatprep.subr.mxu0 0.0
    %1964 = vmatpush1.msra.mxu0 %v1916
    %1965 = vmatprep.subr.mxu0 0.0
    %1966 = vmatpush1.msra.mxu0 %v1919
    %1967 = vmatprep.subr.mxu0 0.0
    %1968 = vmatpush1.msra.mxu0 %v1922
    %1969 = vmatprep.subr.mxu0 0.0
    %1970 = vmatpush1.msra.mxu0 %v1925
    %1971 = vmatprep.subr.mxu0 0.0
    %1972 = vmatpush1.msra.mxu0 %v1928
    %1973 = vmatprep.subr.mxu0 0.0
    %1974 = vmatpush1.msra.mxu0 %v1931
    %1975 = vmatprep.subr.mxu0 0.0
    %1976 = vmatpush1.msra.mxu0 %v1934
    %1977 = vmatprep.subr.mxu0 0.0
    %1978 = vmatpush1.msra.mxu0 %v1937
    %1979 = vmatprep.subr.mxu0 0.0
    %1980 = vmatpush1.msra.mxu0 %v1940
    %1981 = vmatprep.subr.mxu0 0.0
    %1982 = vmatpush1.msra.mxu0 %v1943
    %1983 = vmatprep.subr.mxu0 0.0
    %1984 = vmatpush1.msra.mxu0 %v1946
    %1985 = vmatprep.subr.mxu0 0.0
    %1986 = vmatpush1.msra.mxu0 %v1949
    %1987 = vmatprep.subr.mxu0 0.0
    %1988 = vmatpush1.msra.mxu0 %v1952
    %1989 = vmatprep.subr.mxu0 0.0
    %1990 = vmatpush1.msra.mxu0 %v1955
    %1991 = vmatprep.subr.mxu0 0.0
    %1992 = vmatpush1.msra.mxu0 %v1958
    %1993 = vmatprep.subr.mxu0 0.0
    %1994 = vmatpush1.msra.mxu0 %v1961
    %1995 = vmatprep.subr.mxu0 0.0
    %1996 = vmatpush1.msra.mxu0 0.0
    %1997 = vmatprep.subr.mxu0 0.0
    %1998 = vmatpush1.msra.mxu0 0.0
    %1999 = vmatprep.subr.mxu0 0.0
    %2000 = vmatpush1.msra.mxu0 0.0
    %2001 = vmatprep.subr.mxu0 0.0
    %2002 = vmatpush1.msra.mxu0 0.0
    %2003 = vmatprep.subr.mxu0 0.0
    %2004 = vmatpush1.msra.mxu0 0.0
    %2005 = vmatprep.subr.mxu0 0.0
    %2006 = vmatpush1.msra.mxu0 0.0
    %2007 = vmatprep.subr.mxu0 0.0
    %2008 = vmatpush1.msra.mxu0 0.0
    %2009 = vmatprep.subr.mxu0 0.0
    %2010 = vmatpush1.msra.mxu0 0.0
    %2011 = vmatprep.subr.mxu0 0.0
    %2012 = vmatpush1.msra.mxu0 0.0
    %2013 = vmatprep.subr.mxu0 0.0
    %2014 = vmatpush1.msra.mxu0 0.0
    %2015 = vmatprep.subr.mxu0 0.0
    %2016 = vmatpush1.msra.mxu0 0.0
    %2017 = vmatprep.subr.mxu0 0.0
    %2018 = vmatpush1.msra.mxu0 0.0
    %2019 = vmatprep.subr.mxu0 0.0
    %2020 = vmatpush1.msra.mxu0 0.0
    %2021 = vmatprep.subr.mxu0 0.0
    %2022 = vmatpush1.msra.mxu0 0.0
    %2023 = vmatprep.subr.mxu0 0.0
    %2024 = vmatpush1.msra.mxu0 0.0
    %2025 = vmatprep.subr.mxu0 0.0
    %2026 = vmatpush1.msra.mxu0 0.0
    %2027 = vmatprep.mubr.f32.mxu0 0.0
    %2028 = vmatmul.mubr.f32.gmra.mrb[0].mxu0 %v110
    %v2029 = vpop.f32.mrb[0].mxu0
    %v2030 = vadd.f32 0.0, %v2029
    %v2031 = vpop.f32.mrb[0].mxu0
    %2032 = vdwg.mxu0
    %2033 = vmatprep.subr.mxu0 0.0
    %2034 = vmatpush1.msra.mxu0 %v1915
    %2035 = vmatprep.subr.mxu0 0.0
    %2036 = vmatpush1.msra.mxu0 %v1918
    %2037 = vmatprep.subr.mxu0 0.0
    %2038 = vmatpush1.msra.mxu0 %v1921
    %2039 = vmatprep.subr.mxu0 0.0
    %2040 = vmatpush1.msra.mxu0 %v1924
    %2041 = vmatprep.subr.mxu0 0.0
    %2042 = vmatpush1.msra.mxu0 %v1927
    %2043 = vmatprep.subr.mxu0 0.0
    %2044 = vmatpush1.msra.mxu0 %v1930
    %2045 = vmatprep.subr.mxu0 0.0
    %2046 = vmatpush1.msra.mxu0 %v1933
    %2047 = vmatprep.subr.mxu0 0.0
    %2048 = vmatpush1.msra.mxu0 %v1936
    %2049 = vmatprep.subr.mxu0 0.0
    %2050 = vmatpush1.msra.mxu0 %v1939
    %2051 = vmatprep.subr.mxu0 0.0
    %2052 = vmatpush1.msra.mxu0 %v1942
    %2053 = vmatprep.subr.mxu0 0.0
    %2054 = vmatpush1.msra.mxu0 %v1945
    %2055 = vmatprep.subr.mxu0 0.0
    %2056 = vmatpush1.msra.mxu0 %v1948
    %2057 = vmatprep.subr.mxu0 0.0
    %2058 = vmatpush1.msra.mxu0 %v1951
    %2059 = vmatprep.subr.mxu0 0.0
    %2060 = vmatpush1.msra.mxu0 %v1954
    %2061 = vmatprep.subr.mxu0 0.0
    %2062 = vmatpush1.msra.mxu0 %v1957
    %2063 = vmatprep.subr.mxu0 0.0
    %2064 = vmatpush1.msra.mxu0 %v1960
    %2065 = vmatprep.subr.mxu0 0.0
    %2066 = vmatpush1.msra.mxu0 0.0
    %2067 = vmatprep.subr.mxu0 0.0
    %2068 = vmatpush1.msra.mxu0 0.0
    %2069 = vmatprep.subr.mxu0 0.0
    %2070 = vmatpush1.msra.mxu0 0.0
    %2071 = vmatprep.subr.mxu0 0.0
    %2072 = vmatpush1.msra.mxu0 0.0
    %2073 = vmatprep.subr.mxu0 0.0
    %2074 = vmatpush1.msra.mxu0 0.0
    %2075 = vmatprep.subr.mxu0 0.0
    %2076 = vmatpush1.msra.mxu0 0.0
    %2077 = vmatprep.subr.mxu0 0.0
    %2078 = vmatpush1.msra.mxu0 0.0
    %2079 = vmatprep.subr.mxu0 0.0
    %2080 = vmatpush1.msra.mxu0 0.0
    %2081 = vmatprep.subr.mxu0 0.0
    %2082 = vmatpush1.msra.mxu0 0.0
    %2083 = vmatprep.subr.mxu0 0.0
    %2084 = vmatpush1.msra.mxu0 0.0
    %2085 = vmatprep.subr.mxu0 0.0
    %2086 = vmatpush1.msra.mxu0 0.0
    %2087 = vmatprep.subr.mxu0 0.0
    %2088 = vmatpush1.msra.mxu0 0.0
    %2089 = vmatprep.subr.mxu0 0.0
    %2090 = vmatpush1.msra.mxu0 0.0
    %2091 = vmatprep.subr.mxu0 0.0
    %2092 = vmatpush1.msra.mxu0 0.0
    %2093 = vmatprep.subr.mxu0 0.0
    %2094 = vmatpush1.msra.mxu0 0.0
    %2095 = vmatprep.subr.mxu0 0.0
    %2096 = vmatpush1.msra.mxu0 0.0
    %2097 = vmatprep.mubr.f32.mxu0 0.0
    %2098 = vmatmul.mubr.f32.gmra.mrb[0].mxu0 %v109
    %v2099 = vpop.f32.mrb[0].mxu0
    %v2100 = vadd.f32 %v2030, %v2099
    %v2101 = vpop.f32.mrb[0].mxu0
    %2102 = vdwg.mxu0
    %2103 = vmatprep.subr.mxu0 0.0
    %2104 = vmatpush1.msra.mxu0 %v1917
    %2105 = vmatprep.subr.mxu0 0.0
    %2106 = vmatpush1.msra.mxu0 %v1920
    %2107 = vmatprep.subr.mxu0 0.0
    %2108 = vmatpush1.msra.mxu0 %v1923
    %2109 = vmatprep.subr.mxu0 0.0
    %2110 = vmatpush1.msra.mxu0 %v1926
    %2111 = vmatprep.subr.mxu0 0.0
    %2112 = vmatpush1.msra.mxu0 %v1929
    %2113 = vmatprep.subr.mxu0 0.0
    %2114 = vmatpush1.msra.mxu0 %v1932
    %2115 = vmatprep.subr.mxu0 0.0
    %2116 = vmatpush1.msra.mxu0 %v1935
    %2117 = vmatprep.subr.mxu0 0.0
    %2118 = vmatpush1.msra.mxu0 %v1938
    %2119 = vmatprep.subr.mxu0 0.0
    %2120 = vmatpush1.msra.mxu0 %v1941
    %2121 = vmatprep.subr.mxu0 0.0
    %2122 = vmatpush1.msra.mxu0 %v1944
    %2123 = vmatprep.subr.mxu0 0.0
    %2124 = vmatpush1.msra.mxu0 %v1947
    %2125 = vmatprep.subr.mxu0 0.0
    %2126 = vmatpush1.msra.mxu0 %v1950
    %2127 = vmatprep.subr.mxu0 0.0
    %2128 = vmatpush1.msra.mxu0 %v1953
    %2129 = vmatprep.subr.mxu0 0.0
    %2130 = vmatpush1.msra.mxu0 %v1956
    %2131 = vmatprep.subr.mxu0 0.0
    %2132 = vmatpush1.msra.mxu0 %v1959
    %2133 = vmatprep.subr.mxu0 0.0
    %2134 = vmatpush1.msra.mxu0 %v1962
    %2135 = vmatprep.subr.mxu0 0.0
    %2136 = vmatpush1.msra.mxu0 0.0
    %2137 = vmatprep.subr.mxu0 0.0
    %2138 = vmatpush1.msra.mxu0 0.0
    %2139 = vmatprep.subr.mxu0 0.0
    %2140 = vmatpush1.msra.mxu0 0.0
    %2141 = vmatprep.subr.mxu0 0.0
    %2142 = vmatpush1.msra.mxu0 0.0
    %2143 = vmatprep.subr.mxu0 0.0
    %2144 = vmatpush1.msra.mxu0 0.0
    %2145 = vmatprep.subr.mxu0 0.0
    %2146 = vmatpush1.msra.mxu0 0.0
    %2147 = vmatprep.subr.mxu0 0.0
    %2148 = vmatpush1.msra.mxu0 0.0
    %2149 = vmatprep.subr.mxu0 0.0
    %2150 = vmatpush1.msra.mxu0 0.0
    %2151 = vmatprep.subr.mxu0 0.0
    %2152 = vmatpush1.msra.mxu0 0.0
    %2153 = vmatprep.subr.mxu0 0.0
    %2154 = vmatpush1.msra.mxu0 0.0
    %2155 = vmatprep.subr.mxu0 0.0
    %2156 = vmatpush1.msra.mxu0 0.0
    %2157 = vmatprep.subr.mxu0 0.0
    %2158 = vmatpush1.msra.mxu0 0.0
    %2159 = vmatprep.subr.mxu0 0.0
    %2160 = vmatpush1.msra.mxu0 0.0
    %2161 = vmatprep.subr.mxu0 0.0
    %2162 = vmatpush1.msra.mxu0 0.0
    %2163 = vmatprep.subr.mxu0 0.0
    %2164 = vmatpush1.msra.mxu0 0.0
    %2165 = vmatprep.subr.mxu0 0.0
    %2166 = vmatpush1.msra.mxu0 0.0
    %2167 = vmatprep.mubr.f32.mxu0 0.0
    %2168 = vmatmul.mubr.f32.gmra.mrb[0].mxu0 %v1914
    %v2169 = vpop.f32.mrb[0].mxu0
    %v2170 = vadd.f32 0.0, %v2169
    %v2171 = vpop.f32.mrb[0].mxu0
    %2172 = vdwg.mxu0
    %v2173 = vadd.f32 %v2100, %v2170
    %v2174 = vrot.slane %v212, 5
    %v2176 = vadd.f32 %v2173, %v2174
    %v2177 = vmul.f32 %v2176, 0.5
    %v2178 = vmul.f32 %v2176, 0.044715
    %v2179 = vmul.f32 %v2178, %v2176
    %v2180 = vmul.f32 %v2179, %v2176
    %v2181 = vadd.f32 %v2176, %v2180
    %v2182 = vmul.f32 %v2181, 0.7978846
    %v2183 = vtanh.pop %v2182
    %v2184 = vadd.f32 %v2183, 1.0
    %v2185 = vmul.f32 %v2177, %v2184
    %v2186 = vrot.slane %v211, 6
    %v2188 = vmul.f32 %v2185, %v2186
    %2189 = vset.pattern.permute.xlu0 0
    %2190 = vperm.xlu0 %2189, %v212
    %v2191 = vpop.permute.xlu0 %2190
    %v2192 = vrot.slane %v2191, 6
    %2194 = vmatprep.subr.mxu0 0.0
    %2195 = vmatpush1.msra.mxu0 %v176
    %2196 = vmatprep.subr.mxu0 0.0
    %2197 = vmatpush1.msra.mxu0 %v177
    %2198 = vmatprep.subr.mxu0 0.0
    %2199 = vmatpush1.msra.mxu0 %v178
    %2200 = vmatprep.subr.mxu0 0.0
    %2201 = vmatpush1.msra.mxu0 %v179
    %2202 = vmatprep.subr.mxu0 0.0
    %2203 = vmatpush1.msra.mxu0 %v180
    %2204 = vmatprep.subr.mxu0 0.0
    %2205 = vmatpush1.msra.mxu0 %v181
    %2206 = vmatprep.subr.mxu0 0.0
    %2207 = vmatpush1.msra.mxu0 %v182
    %2208 = vmatprep.subr.mxu0 0.0
    %2209 = vmatpush1.msra.mxu0 %v183
    %2210 = vmatprep.subr.mxu0 0.0
    %2211 = vmatpush1.msra.mxu0 %v184
    %2212 = vmatprep.subr.mxu0 0.0
    %2213 = vmatpush1.msra.mxu0 %v185
    %2214 = vmatprep.subr.mxu0 0.0
    %2215 = vmatpush1.msra.mxu0 %v186
    %2216 = vmatprep.subr.mxu0 0.0
    %2217 = vmatpush1.msra.mxu0 %v187
    %2218 = vmatprep.subr.mxu0 0.0
    %2219 = vmatpush1.msra.mxu0 %v188
    %2220 = vmatprep.subr.mxu0 0.0
    %2221 = vmatpush1.msra.mxu0 %v189
    %2222 = vmatprep.subr.mxu0 0.0
    %2223 = vmatpush1.msra.mxu0 %v190
    %2224 = vmatprep.subr.mxu0 0.0
    %2225 = vmatpush1.msra.mxu0 %v191
    %2226 = vmatprep.subr.mxu0 0.0
    %2227 = vmatpush1.msra.mxu0 0.0
    %2228 = vmatprep.subr.mxu0 0.0
    %2229 = vmatpush1.msra.mxu0 0.0
    %2230 = vmatprep.subr.mxu0 0.0
    %2231 = vmatpush1.msra.mxu0 0.0
    %2232 = vmatprep.subr.mxu0 0.0
    %2233 = vmatpush1.msra.mxu0 0.0
    %2234 = vmatprep.subr.mxu0 0.0
    %2235 = vmatpush1.msra.mxu0 0.0
    %2236 = vmatprep.subr.mxu0 0.0
    %2237 = vmatpush1.msra.mxu0 0.0
    %2238 = vmatprep.subr.mxu0 0.0
    %2239 = vmatpush1.msra.mxu0 0.0
    %2240 = vmatprep.subr.mxu0 0.0
    %2241 = vmatpush1.msra.mxu0 0.0
    %2242 = vmatprep.subr.mxu0 0.0
    %2243 = vmatpush1.msra.mxu0 0.0
    %2244 = vmatprep.subr.mxu0 0.0
    %2245 = vmatpush1.msra.mxu0 0.0
    %2246 = vmatprep.subr.mxu0 0.0
    %2247 = vmatpush1.msra.mxu0 0.0
    %2248 = vmatprep.subr.mxu0 0.0
    %2249 = vmatpush1.msra.mxu0 0.0
    %2250 = vmatprep.subr.mxu0 0.0
    %2251 = vmatpush1.msra.mxu0 0.0
    %2252 = vmatprep.subr.mxu0 0.0
    %2253 = vmatpush1.msra.mxu0 0.0
    %2254 = vmatprep.subr.mxu0 0.0
    %2255 = vmatpush1.msra.mxu0 0.0
    %2256 = vmatprep.subr.mxu0 0.0
    %2257 = vmatpush1.msra.mxu0 0.0
    %2258 = vmatprep.mubr.f32.mxu0 0.0
    %2259 = vmatmul.mubr.f32.gmra.mrb[0].mxu0 %v2188
    %v2260 = vpop.f32.mrb[0].mxu0
    %v2261 = vadd.f32 %v2192, %v2260
    %v2262 = vpop.f32.mrb[0].mxu0
    %2263 = vdwg.mxu0
    %v2264 = vxor.u32 %v2261, 2147483648
    %v2265 = vmul.f32 %v2264, 1.442695
    %v2266 = vpow.pop %v2265
    %v2267 = vadd.f32 %v2266, 1.0
    %v2268 = vrcp.pop %v2267
    %v2269 = vmul.f32 1.0, %v2268
    %2270 = vst [vmem:[#allocation11] sm:$0x1] %v1914
    %vm2271 = vcmask 24576
    %2272 = vst.msk [vmem:[#allocation12] sm:$0x1] %vm2271, %v2269
    // Predicated region
    $region70: #{tpu_custom_call.1} parent=1 // pred_check
      _
    $region71: #{tpu_custom_call.1} parent=1 // pred_check_branch
      %2274 = sbr.rel (0) target = $region73
    $region72: #{tpu_custom_call.1} parent=1 // pred_region
      %s2276 = ssub.s32 16, 16
      %2277 = vsyncadd [#allocation4], %s2276
      %s2279 = sshll.u32 [#allocation11], 4
      %s2280 = int_to_ptr.vmem [resolvable:$true] %s2279
      %2282 = dma.vmem_to_hbm [thread:$0]  %s2280, 16, %s12, [#allocation4]
    $region73: #{tpu_custom_call.1} parent=1 // pred_fallthru
      _
    // Predicated region
    $region74: #{tpu_custom_call.1} parent=1 // pred_check
      _
    $region75: #{tpu_custom_call.1} parent=1 // pred_check_branch
      %2284 = sbr.rel (0) target = $region77
    $region76: #{tpu_custom_call.1} parent=1 // pred_region
      %s2286 = ssub.s32 16, 16
      %2287 = vsyncadd [#allocation13], %s2286
      %s2289 = sshll.u32 [#allocation12], 4
      %s2290 = int_to_ptr.vmem [resolvable:$true] %s2289
      %2292 = dma.vmem_to_hbm [thread:$0]  %s2290, 16, %s13, [#allocation13]
    $region77: #{tpu_custom_call.1} parent=1 // pred_fallthru
      _
    // Predicated region
    $region78: #{tpu_custom_call.1} parent=1 // pred_check
      _
    $region79: #{tpu_custom_call.1} parent=1 // pred_check_branch
      %2294 = sbr.rel (0) target = $region81
    $region80: #{tpu_custom_call.1} parent=1 // pred_region
      %2295 = dma.done [#allocation4], 16
    $region81: #{tpu_custom_call.1} parent=1 // pred_fallthru
      _
    // Predicated region
    $region82: #{tpu_custom_call.1} parent=1 // pred_check
      _
    $region83: #{tpu_custom_call.1} parent=1 // pred_check_branch
      %2297 = sbr.rel (0) target = $region85
    $region84: #{tpu_custom_call.1} parent=1 // pred_region
      %2298 = dma.done [#allocation13], 16
    $region85: #{tpu_custom_call.1} parent=1 // pred_fallthru
      _
    %2299 = vsyncpa [#allocation3], 1
    %2300 = vsyncpa [#allocation6], 1
    %2301 = vsyncpa [#allocation9], 1
    %2302 = vsyncpa [#allocation4], 1
    %2303 = vsyncpa [#allocation13], 1

</llo_original>
